<compile_context>
chip_gen: v7x
topology: tpu7x:2x2x1
jax: 0.10.0
libtpu: 0.0.40
codegen_flags: <defaults>
</compile_context>

<pallas_src>
from functools import partial

import jax
import jax.numpy as jnp
from jax import lax
from jax.experimental import pallas as pl
from jax.experimental.pallas import tpu as pltpu

# ----------------------- small synthetic config ----------------------------
VOCAB_SIZE = 50
EMBEDDING_SIZE = 16
HIDDEN_SIZE = 32
RNN_NUM_LAYERS = 1          # TODO(synk): stacked (num_layers > 1) RNN not implemented; config uses 1 layer
RNN_BIDIRECTIONAL = True    # required by fc(in_features=hidden*2)
MAX_ESSAY_LEN = 8           # sequence length
BATCH = 2
DROPOUT_RATE = 0.0          # nn.RNN dropout only acts between stacked layers; no-op with 1 layer


# ------------------- single fused kernel: whole forward --------------------
def rnn_fused_kernel(xid_ref, emb_ref, wih_ref, bih_ref, whh_f_ref, whh_b_ref,
                     wfc_ref, bfc_ref, out_ref, *, seq_len, batch, hidden, inv_len):
    S, B, H = seq_len, batch, hidden
    V = emb_ref.shape[0]
    SB = S * B

    # ---- embedding lookup via one-hot matmul (time-major rows: r = t*B + b)
    ids = xid_ref[...]                                             # (S*B, 1) int32
    vocab_iota = lax.broadcasted_iota(jnp.int32, (SB, V), 1)
    onehot = (vocab_iota == ids).astype(jnp.float32)               # (S*B, V)
    e = jnp.dot(onehot, emb_ref[...],
                preferred_element_type=jnp.float32)                # (S*B, E)

    # ---- hoisted input projection for BOTH directions in one matmul
    gx = jnp.dot(e, wih_ref[...],
                 preferred_element_type=jnp.float32) + bih_ref[...]  # (S*B, 2H)
    gxf = gx[:, :H]                                                # fwd pre-activations (S*B, H)
    gxb = gx[:, H:]                                                # bwd pre-activations (S*B, H)

    whh_f = whh_f_ref[...]                                         # (H, H)
    whh_b = whh_b_ref[...]                                         # (H, H)

    h_f = jnp.zeros((B, H), jnp.float32)
    h_b = jnp.zeros((B, H), jnp.float32)
    acc_f = jnp.zeros((B, H), jnp.float32)
    acc_b = jnp.zeros((B, H), jnp.float32)

    # ---- fully unrolled, interleaved fwd/bwd tanh recurrence (static S)
    for t in range(S):
        gf = gxf[t * B:(t + 1) * B, :]                             # time t        (B, H)
        gb = gxb[(S - 1 - t) * B:(S - t) * B, :]                   # time S-1-t    (B, H)
        h_f = jnp.tanh(gf + jnp.dot(h_f, whh_f, preferred_element_type=jnp.float32))
        h_b = jnp.tanh(gb + jnp.dot(h_b, whh_b, preferred_element_type=jnp.float32))
        acc_f = acc_f + h_f
        acc_b = acc_b + h_b

    # ---- sum-over-time pooling (scaled by 1/max_essay_len) + fc + sigmoid.
    # fc is done as elementwise multiply + lane reduction (avoids an N=1 MXU pass):
    #   logits = (1/L) * [acc_f | acc_b] . wfc + bfc
    wfc = wfc_ref[...]                                             # (1, 2H)
    lf = jnp.sum(acc_f * wfc[:, :H], axis=-1, keepdims=True)       # (B, 1)
    lb = jnp.sum(acc_b * wfc[:, H:], axis=-1, keepdims=True)       # (B, 1)
    logits = (lf + lb) * inv_len + bfc_ref[...]                    # (B, 1)
    out_ref[...] = jax.nn.sigmoid(logits)


def rnn_forward(x_ids, p):
    B, S = x_ids.shape
    H = HIDDEN_SIZE
    # tiny glue: reorder token ids to time-major (S*B, 1) so per-step slices in
    # the kernel are contiguous sublane blocks.
    x_tm = jnp.transpose(x_ids).reshape(S * B, 1).astype(jnp.int32)
    vspec = pl.BlockSpec(memory_space=pltpu.MemorySpace.VMEM)
    out = pl.pallas_call(
        partial(rnn_fused_kernel, seq_len=S, batch=B, hidden=H,
                inv_len=1.0 / float(MAX_ESSAY_LEN)),
        out_shape=jax.ShapeDtypeStruct((B, 1), jnp.float32),
        in_specs=[vspec] * 8,
        out_specs=vspec,
    )(x_tm, p["emb"], p["wih"], p["bih"], p["whh_f"], p["whh_b"],
      p["wfc"], p["bfc"])
    return out[:, 0]                                               # squeeze -> (B,)


# --------------------------- pure-JAX reference -----------------------------
def reference_forward(x_ids, p):
    H = HIDDEN_SIZE
    e = p["emb"][x_ids]                                            # (B, S, E)
    wih_f, wih_b = p["wih"][:, :H], p["wih"][:, H:]
    b_f, b_b = p["bih"][:, :H], p["bih"][:, H:]

    def run_dir(xs, wih, whh, b):
        h = jnp.zeros((x_ids.shape[0], H), jnp.float32)
        acc = jnp.zeros_like(h)
        for x_t in xs:
            h = jnp.tanh(x_t @ wih + h @ whh + b)
            acc = acc + h
        return acc

    xs = [e[:, t, :] for t in range(MAX_ESSAY_LEN)]
    acc_f = run_dir(xs, wih_f, p["whh_f"], b_f)
    acc_b = run_dir(xs[::-1], wih_b, p["whh_b"], b_b)
    pooled = jnp.concatenate([acc_f, acc_b], axis=-1) * (1.0 / MAX_ESSAY_LEN)
    logits = jnp.sum(pooled * p["wfc"], axis=-1) + p["bfc"][0, 0]
    return jax.nn.sigmoid(logits)


# --------------------------- deterministic params ---------------------------
def init_params(key):
    ks = jax.random.split(key, 8)
    u = lambda k, shape, s=0.1: jax.random.uniform(k, shape, jnp.float32, -s, s)
    E, H, V = EMBEDDING_SIZE, HIDDEN_SIZE, VOCAB_SIZE
    return {
        "emb": u(ks[0], (V, E), 0.5),
        # input->hidden weights, pre-transposed and concatenated: [W_ih_f^T | W_ih_b^T]
        "wih": u(ks[1], (E, 2 * H)),
        # combined per-direction bias (b_ih + b_hh): [b_f | b_b]
        "bih": u(ks[2], (1, 2 * H)),
        "whh_f": u(ks[3], (H, H)),
        "whh_b": u(ks[4], (H, H)),
        # fc weight kept as a (1, 2H) lane-row (elementwise mul + reduce in kernel)
        "wfc": u(ks[5], (1, 2 * H)),
        "bfc": u(ks[6], (1, 1)),
    }


if __name__ == "__main__":
    key = jax.random.PRNGKey(0)
    pkey, xkey = jax.random.split(key)
    params = init_params(pkey)
    x_ids = jax.random.randint(xkey, (BATCH, MAX_ESSAY_LEN), 0, VOCAB_SIZE,
                               dtype=jnp.int32)

    fwd = jax.jit(rnn_forward)
    out = jax.block_until_ready(fwd(x_ids, params))

    ref = reference_forward(x_ids, params)
    assert out.shape == (BATCH,), out.shape
    assert jnp.allclose(out, ref, atol=1e-4, rtol=1e-4), (out, ref)
    print("KERNEL_OK")
</pallas_src>

<mosaic_0001>
module attributes {stable_mosaic.version = 11 : i64} {
  func.func @rnn_fused_kernel(%arg0: memref<16x1xi32, #tpu.memory_space<vmem>>, %arg1: memref<50x16xf32, #tpu.memory_space<vmem>>, %arg2: memref<16x64xf32, #tpu.memory_space<vmem>>, %arg3: memref<1x64xf32, #tpu.memory_space<vmem>>, %arg4: memref<32x32xf32, #tpu.memory_space<vmem>>, %arg5: memref<32x32xf32, #tpu.memory_space<vmem>>, %arg6: memref<1x64xf32, #tpu.memory_space<vmem>>, %arg7: memref<1x1xf32, #tpu.memory_space<vmem>>, %arg8: memref<2x1xf32, #tpu.memory_space<vmem>>) attributes {dimension_semantics = [], scalar_prefetch = 0 : i64, scratch_operands = 0 : i64, tpu.core_type = #tpu.core_type<tc>} {
    %c0 = arith.constant 0 : index
    %c0_0 = arith.constant 0 : index
    %0 = vector.load %arg0[%c0, %c0_0] : memref<16x1xi32, #tpu.memory_space<vmem>>, vector<16x1xi32>
    %1 = tpu.iota {dimensions = array<i32: 1>} : vector<16x50xi32>
    %2 = vector.broadcast %0 : vector<16x1xi32> to vector<16x50xi32>
    %3 = arith.cmpi eq, %1, %2 : vector<16x50xi32>
    %4 = arith.extui %3 : vector<16x50xi1> to vector<16x50xi32>
    %5 = arith.sitofp %4 : vector<16x50xi32> to vector<16x50xf32>
    %c0_1 = arith.constant 0 : index
    %c0_2 = arith.constant 0 : index
    %6 = vector.load %arg1[%c0_1, %c0_2] : memref<50x16xf32, #tpu.memory_space<vmem>>, vector<50x16xf32>
    %cst = arith.constant dense<0.000000e+00> : vector<16x16xf32>
    %7 = tpu.matmul %5, %6, %cst {dimension_numbers = #tpu.dot_dimension_numbers<[1], [0], [0], [1], [0, 0, 1, 1], [], []>} : vector<16x50xf32>, vector<50x16xf32>, vector<16x16xf32> -> vector<16x16xf32>
    %c0_3 = arith.constant 0 : index
    %c0_4 = arith.constant 0 : index
    %8 = vector.load %arg2[%c0_3, %c0_4] : memref<16x64xf32, #tpu.memory_space<vmem>>, vector<16x64xf32>
    %cst_5 = arith.constant dense<0.000000e+00> : vector<16x64xf32>
    %9 = tpu.matmul %7, %8, %cst_5 {dimension_numbers = #tpu.dot_dimension_numbers<[1], [0], [0], [1], [0, 0, 1, 1], [], []>} : vector<16x16xf32>, vector<16x64xf32>, vector<16x64xf32> -> vector<16x64xf32>
    %c0_6 = arith.constant 0 : index
    %c0_7 = arith.constant 0 : index
    %10 = vector.load %arg3[%c0_6, %c0_7] : memref<1x64xf32, #tpu.memory_space<vmem>>, vector<1x64xf32>
    %11 = vector.broadcast %10 : vector<1x64xf32> to vector<16x64xf32>
    %12 = arith.addf %9, %11 : vector<16x64xf32>
    %13 = vector.extract_strided_slice %12 {offsets = [0, 0], sizes = [16, 32], strides = [1, 1]} : vector<16x64xf32> to vector<16x32xf32>
    %14 = vector.extract_strided_slice %12 {offsets = [0, 32], sizes = [16, 32], strides = [1, 1]} : vector<16x64xf32> to vector<16x32xf32>
    %c0_8 = arith.constant 0 : index
    %c0_9 = arith.constant 0 : index
    %15 = vector.load %arg4[%c0_8, %c0_9] : memref<32x32xf32, #tpu.memory_space<vmem>>, vector<32x32xf32>
    %c0_10 = arith.constant 0 : index
    %c0_11 = arith.constant 0 : index
    %16 = vector.load %arg5[%c0_10, %c0_11] : memref<32x32xf32, #tpu.memory_space<vmem>>, vector<32x32xf32>
    %cst_12 = arith.constant 0.000000e+00 : f32
    %17 = vector.broadcast %cst_12 : f32 to vector<2x32xf32>
    %cst_13 = arith.constant 0.000000e+00 : f32
    %18 = vector.broadcast %cst_13 : f32 to vector<2x32xf32>
    %cst_14 = arith.constant 0.000000e+00 : f32
    %19 = vector.broadcast %cst_14 : f32 to vector<2x32xf32>
    %cst_15 = arith.constant 0.000000e+00 : f32
    %20 = vector.broadcast %cst_15 : f32 to vector<2x32xf32>
    %21 = vector.extract_strided_slice %13 {offsets = [0, 0], sizes = [2, 32], strides = [1, 1]} : vector<16x32xf32> to vector<2x32xf32>
    %22 = vector.extract_strided_slice %14 {offsets = [14, 0], sizes = [2, 32], strides = [1, 1]} : vector<16x32xf32> to vector<2x32xf32>
    %cst_16 = arith.constant dense<0.000000e+00> : vector<2x32xf32>
    %23 = tpu.matmul %17, %15, %cst_16 {dimension_numbers = #tpu.dot_dimension_numbers<[1], [0], [0], [1], [0, 0, 1, 1], [], []>} : vector<2x32xf32>, vector<32x32xf32>, vector<2x32xf32> -> vector<2x32xf32>
    %24 = arith.addf %21, %23 : vector<2x32xf32>
    %25 = math.tanh %24 : vector<2x32xf32>
    %cst_17 = arith.constant dense<0.000000e+00> : vector<2x32xf32>
    %26 = tpu.matmul %18, %16, %cst_17 {dimension_numbers = #tpu.dot_dimension_numbers<[1], [0], [0], [1], [0, 0, 1, 1], [], []>} : vector<2x32xf32>, vector<32x32xf32>, vector<2x32xf32> -> vector<2x32xf32>
    %27 = arith.addf %22, %26 : vector<2x32xf32>
    %28 = math.tanh %27 : vector<2x32xf32>
    %29 = arith.addf %19, %25 : vector<2x32xf32>
    %30 = arith.addf %20, %28 : vector<2x32xf32>
    %31 = vector.extract_strided_slice %13 {offsets = [2, 0], sizes = [2, 32], strides = [1, 1]} : vector<16x32xf32> to vector<2x32xf32>
    %32 = vector.extract_strided_slice %14 {offsets = [12, 0], sizes = [2, 32], strides = [1, 1]} : vector<16x32xf32> to vector<2x32xf32>
    %cst_18 = arith.constant dense<0.000000e+00> : vector<2x32xf32>
    %33 = tpu.matmul %25, %15, %cst_18 {dimension_numbers = #tpu.dot_dimension_numbers<[1], [0], [0], [1], [0, 0, 1, 1], [], []>} : vector<2x32xf32>, vector<32x32xf32>, vector<2x32xf32> -> vector<2x32xf32>
    %34 = arith.addf %31, %33 : vector<2x32xf32>
    %35 = math.tanh %34 : vector<2x32xf32>
    %cst_19 = arith.constant dense<0.000000e+00> : vector<2x32xf32>
    %36 = tpu.matmul %28, %16, %cst_19 {dimension_numbers = #tpu.dot_dimension_numbers<[1], [0], [0], [1], [0, 0, 1, 1], [], []>} : vector<2x32xf32>, vector<32x32xf32>, vector<2x32xf32> -> vector<2x32xf32>
    %37 = arith.addf %32, %36 : vector<2x32xf32>
    %38 = math.tanh %37 : vector<2x32xf32>
    %39 = arith.addf %29, %35 : vector<2x32xf32>
    %40 = arith.addf %30, %38 : vector<2x32xf32>
    %41 = vector.extract_strided_slice %13 {offsets = [4, 0], sizes = [2, 32], strides = [1, 1]} : vector<16x32xf32> to vector<2x32xf32>
    %42 = vector.extract_strided_slice %14 {offsets = [10, 0], sizes = [2, 32], strides = [1, 1]} : vector<16x32xf32> to vector<2x32xf32>
    %cst_20 = arith.constant dense<0.000000e+00> : vector<2x32xf32>
    %43 = tpu.matmul %35, %15, %cst_20 {dimension_numbers = #tpu.dot_dimension_numbers<[1], [0], [0], [1], [0, 0, 1, 1], [], []>} : vector<2x32xf32>, vector<32x32xf32>, vector<2x32xf32> -> vector<2x32xf32>
    %44 = arith.addf %41, %43 : vector<2x32xf32>
    %45 = math.tanh %44 : vector<2x32xf32>
    %cst_21 = arith.constant dense<0.000000e+00> : vector<2x32xf32>
    %46 = tpu.matmul %38, %16, %cst_21 {dimension_numbers = #tpu.dot_dimension_numbers<[1], [0], [0], [1], [0, 0, 1, 1], [], []>} : vector<2x32xf32>, vector<32x32xf32>, vector<2x32xf32> -> vector<2x32xf32>
    %47 = arith.addf %42, %46 : vector<2x32xf32>
    %48 = math.tanh %47 : vector<2x32xf32>
    %49 = arith.addf %39, %45 : vector<2x32xf32>
    %50 = arith.addf %40, %48 : vector<2x32xf32>
    %51 = vector.extract_strided_slice %13 {offsets = [6, 0], sizes = [2, 32], strides = [1, 1]} : vector<16x32xf32> to vector<2x32xf32>
    %52 = vector.extract_strided_slice %14 {offsets = [8, 0], sizes = [2, 32], strides = [1, 1]} : vector<16x32xf32> to vector<2x32xf32>
    %cst_22 = arith.constant dense<0.000000e+00> : vector<2x32xf32>
    %53 = tpu.matmul %45, %15, %cst_22 {dimension_numbers = #tpu.dot_dimension_numbers<[1], [0], [0], [1], [0, 0, 1, 1], [], []>} : vector<2x32xf32>, vector<32x32xf32>, vector<2x32xf32> -> vector<2x32xf32>
    %54 = arith.addf %51, %53 : vector<2x32xf32>
    %55 = math.tanh %54 : vector<2x32xf32>
    %cst_23 = arith.constant dense<0.000000e+00> : vector<2x32xf32>
    %56 = tpu.matmul %48, %16, %cst_23 {dimension_numbers = #tpu.dot_dimension_numbers<[1], [0], [0], [1], [0, 0, 1, 1], [], []>} : vector<2x32xf32>, vector<32x32xf32>, vector<2x32xf32> -> vector<2x32xf32>
    %57 = arith.addf %52, %56 : vector<2x32xf32>
    %58 = math.tanh %57 : vector<2x32xf32>
    %59 = arith.addf %49, %55 : vector<2x32xf32>
    %60 = arith.addf %50, %58 : vector<2x32xf32>
    %61 = vector.extract_strided_slice %13 {offsets = [8, 0], sizes = [2, 32], strides = [1, 1]} : vector<16x32xf32> to vector<2x32xf32>
    %62 = vector.extract_strided_slice %14 {offsets = [6, 0], sizes = [2, 32], strides = [1, 1]} : vector<16x32xf32> to vector<2x32xf32>
    %cst_24 = arith.constant dense<0.000000e+00> : vector<2x32xf32>
    %63 = tpu.matmul %55, %15, %cst_24 {dimension_numbers = #tpu.dot_dimension_numbers<[1], [0], [0], [1], [0, 0, 1, 1], [], []>} : vector<2x32xf32>, vector<32x32xf32>, vector<2x32xf32> -> vector<2x32xf32>
    %64 = arith.addf %61, %63 : vector<2x32xf32>
    %65 = math.tanh %64 : vector<2x32xf32>
    %cst_25 = arith.constant dense<0.000000e+00> : vector<2x32xf32>
    %66 = tpu.matmul %58, %16, %cst_25 {dimension_numbers = #tpu.dot_dimension_numbers<[1], [0], [0], [1], [0, 0, 1, 1], [], []>} : vector<2x32xf32>, vector<32x32xf32>, vector<2x32xf32> -> vector<2x32xf32>
    %67 = arith.addf %62, %66 : vector<2x32xf32>
    %68 = math.tanh %67 : vector<2x32xf32>
    %69 = arith.addf %59, %65 : vector<2x32xf32>
    %70 = arith.addf %60, %68 : vector<2x32xf32>
    %71 = vector.extract_strided_slice %13 {offsets = [10, 0], sizes = [2, 32], strides = [1, 1]} : vector<16x32xf32> to vector<2x32xf32>
    %72 = vector.extract_strided_slice %14 {offsets = [4, 0], sizes = [2, 32], strides = [1, 1]} : vector<16x32xf32> to vector<2x32xf32>
    %cst_26 = arith.constant dense<0.000000e+00> : vector<2x32xf32>
    %73 = tpu.matmul %65, %15, %cst_26 {dimension_numbers = #tpu.dot_dimension_numbers<[1], [0], [0], [1], [0, 0, 1, 1], [], []>} : vector<2x32xf32>, vector<32x32xf32>, vector<2x32xf32> -> vector<2x32xf32>
    %74 = arith.addf %71, %73 : vector<2x32xf32>
    %75 = math.tanh %74 : vector<2x32xf32>
    %cst_27 = arith.constant dense<0.000000e+00> : vector<2x32xf32>
    %76 = tpu.matmul %68, %16, %cst_27 {dimension_numbers = #tpu.dot_dimension_numbers<[1], [0], [0], [1], [0, 0, 1, 1], [], []>} : vector<2x32xf32>, vector<32x32xf32>, vector<2x32xf32> -> vector<2x32xf32>
    %77 = arith.addf %72, %76 : vector<2x32xf32>
    %78 = math.tanh %77 : vector<2x32xf32>
    %79 = arith.addf %69, %75 : vector<2x32xf32>
    %80 = arith.addf %70, %78 : vector<2x32xf32>
    %81 = vector.extract_strided_slice %13 {offsets = [12, 0], sizes = [2, 32], strides = [1, 1]} : vector<16x32xf32> to vector<2x32xf32>
    %82 = vector.extract_strided_slice %14 {offsets = [2, 0], sizes = [2, 32], strides = [1, 1]} : vector<16x32xf32> to vector<2x32xf32>
    %cst_28 = arith.constant dense<0.000000e+00> : vector<2x32xf32>
    %83 = tpu.matmul %75, %15, %cst_28 {dimension_numbers = #tpu.dot_dimension_numbers<[1], [0], [0], [1], [0, 0, 1, 1], [], []>} : vector<2x32xf32>, vector<32x32xf32>, vector<2x32xf32> -> vector<2x32xf32>
    %84 = arith.addf %81, %83 : vector<2x32xf32>
    %85 = math.tanh %84 : vector<2x32xf32>
    %cst_29 = arith.constant dense<0.000000e+00> : vector<2x32xf32>
    %86 = tpu.matmul %78, %16, %cst_29 {dimension_numbers = #tpu.dot_dimension_numbers<[1], [0], [0], [1], [0, 0, 1, 1], [], []>} : vector<2x32xf32>, vector<32x32xf32>, vector<2x32xf32> -> vector<2x32xf32>
    %87 = arith.addf %82, %86 : vector<2x32xf32>
    %88 = math.tanh %87 : vector<2x32xf32>
    %89 = arith.addf %79, %85 : vector<2x32xf32>
    %90 = arith.addf %80, %88 : vector<2x32xf32>
    %91 = vector.extract_strided_slice %13 {offsets = [14, 0], sizes = [2, 32], strides = [1, 1]} : vector<16x32xf32> to vector<2x32xf32>
    %92 = vector.extract_strided_slice %14 {offsets = [0, 0], sizes = [2, 32], strides = [1, 1]} : vector<16x32xf32> to vector<2x32xf32>
    %cst_30 = arith.constant dense<0.000000e+00> : vector<2x32xf32>
    %93 = tpu.matmul %85, %15, %cst_30 {dimension_numbers = #tpu.dot_dimension_numbers<[1], [0], [0], [1], [0, 0, 1, 1], [], []>} : vector<2x32xf32>, vector<32x32xf32>, vector<2x32xf32> -> vector<2x32xf32>
    %94 = arith.addf %91, %93 : vector<2x32xf32>
    %95 = math.tanh %94 : vector<2x32xf32>
    %cst_31 = arith.constant dense<0.000000e+00> : vector<2x32xf32>
    %96 = tpu.matmul %88, %16, %cst_31 {dimension_numbers = #tpu.dot_dimension_numbers<[1], [0], [0], [1], [0, 0, 1, 1], [], []>} : vector<2x32xf32>, vector<32x32xf32>, vector<2x32xf32> -> vector<2x32xf32>
    %97 = arith.addf %92, %96 : vector<2x32xf32>
    %98 = math.tanh %97 : vector<2x32xf32>
    %99 = arith.addf %89, %95 : vector<2x32xf32>
    %100 = arith.addf %90, %98 : vector<2x32xf32>
    %c0_32 = arith.constant 0 : index
    %c0_33 = arith.constant 0 : index
    %101 = vector.load %arg6[%c0_32, %c0_33] : memref<1x64xf32, #tpu.memory_space<vmem>>, vector<1x64xf32>
    %102 = vector.extract_strided_slice %101 {offsets = [0, 0], sizes = [1, 32], strides = [1, 1]} : vector<1x64xf32> to vector<1x32xf32>
    %103 = vector.broadcast %102 : vector<1x32xf32> to vector<2x32xf32>
    %104 = arith.mulf %99, %103 : vector<2x32xf32>
    %cst_34 = arith.constant dense<0.000000e+00> : vector<2xf32>
    %105 = vector.multi_reduction <add>, %104, %cst_34 [1] : vector<2x32xf32> to vector<2xf32>
    %106 = vector.shape_cast %105 : vector<2xf32> to vector<2x1xf32>
    %107 = vector.extract_strided_slice %101 {offsets = [0, 32], sizes = [1, 32], strides = [1, 1]} : vector<1x64xf32> to vector<1x32xf32>
    %108 = vector.broadcast %107 : vector<1x32xf32> to vector<2x32xf32>
    %109 = arith.mulf %100, %108 : vector<2x32xf32>
    %cst_35 = arith.constant dense<0.000000e+00> : vector<2xf32>
    %110 = vector.multi_reduction <add>, %109, %cst_35 [1] : vector<2x32xf32> to vector<2xf32>
    %111 = vector.shape_cast %110 : vector<2xf32> to vector<2x1xf32>
    %112 = arith.addf %106, %111 : vector<2x1xf32>
    %cst_36 = arith.constant 1.250000e-01 : f32
    %113 = vector.broadcast %cst_36 : f32 to vector<2x1xf32>
    %114 = arith.mulf %112, %113 : vector<2x1xf32>
    %c0_37 = arith.constant 0 : index
    %c0_38 = arith.constant 0 : index
    %115 = vector.load %arg7[%c0_37, %c0_38] : memref<1x1xf32, #tpu.memory_space<vmem>>, vector<1x1xf32>
    %116 = vector.broadcast %115 : vector<1x1xf32> to vector<2x1xf32>
    %117 = arith.addf %114, %116 : vector<2x1xf32>
    %118 = arith.negf %117 : vector<2x1xf32>
    %119 = math.exp %118 : vector<2x1xf32>
    %cst_39 = arith.constant 1.000000e+00 : f32
    %120 = vector.broadcast %cst_39 : f32 to vector<2x1xf32>
    %121 = arith.addf %120, %119 : vector<2x1xf32>
    %122 = arith.divf %120, %121 : vector<2x1xf32>
    %c0_40 = arith.constant 0 : index
    %c0_41 = arith.constant 0 : index
    %123 = vector.load %arg8[%c0_40, %c0_41] : memref<2x1xf32, #tpu.memory_space<vmem>>, vector<2x1xf32>
    tpu.vector_store %arg8[%c0_40, %c0_41], %122 {strides = array<i32>} : memref<2x1xf32, #tpu.memory_space<vmem>>, vector<2x1xf32>,
    return
  }
}

</mosaic_0001>

<llo_original>
// kernel: rnn_forward.1
$region0: #{rnn_forward.1}
  #allocation0 [shape = 'u32[]', space=smem, size = 0x4, offset = 0x4, fixed_abs, tag = 'smem constant byte address 0x4 - core index']
  #allocation1 [shape = 'u32[144,128]{1,0:T(1,128)}', space=vmem, size = 0x12000, scoped, tag = 'internal scratch']
  #allocation2 [shape = 'f32[1,1]{1,0:T(1,128)S(1)}', space=vmem, size = 0x200, scoped, tag = 'scoped memory for rnn_forward.1']
  %s0 = inlined_call_operand.vmem [shape: s32[16,1], index: 0, kind: input, shape index: {}]
  %s1 = inlined_call_operand.vmem [shape: f32[50,16], index: 1, kind: input, shape index: {}]
  %s2 = inlined_call_operand.vmem [shape: f32[16,64], index: 2, kind: input, shape index: {}]
  %s3 = inlined_call_operand.vmem [shape: f32[1,64], index: 3, kind: input, shape index: {}]
  %s4 = inlined_call_operand.vmem [shape: f32[32,32], index: 4, kind: input, shape index: {}]
  %s5 = inlined_call_operand.vmem [shape: f32[32,32], index: 5, kind: input, shape index: {}]
  %s6 = inlined_call_operand.vmem [shape: f32[1,64], index: 6, kind: input, shape index: {}]
  %s7 = inlined_call_operand.<no memory space> [shape: f32[1,1], index: 7, kind: input, shape index: {}]
  %s8 = inlined_call_operand.vmem [shape: f32[2,1], index: 8, kind: output, shape index: {}]
  %s9 = sld [smem:[#allocation0]]
  $region42: #{rnn_forward.1} parent=0
    _
  %s11 = ssub.s32 1, %s9
  %s12 = scalar_select 0, %s11, %s9
  %v13 = vstv %s7
  %14 = vst [vmem:[#allocation2] sm:$0x1] %v13
  // Predicated region
  $region2: #{rnn_forward.1} parent=0 // pred_check
    _
  $region3: #{rnn_forward.1} parent=0 // pred_check_branch
    %16 = sbr.rel (0) target = $region5
  $region4: #{rnn_forward.1} parent=0 // pred_region
    _
  $region5: #{rnn_forward.1} parent=0 // pred_fallthru
    _
  // Predicated region
  $region6: #{rnn_forward.1} parent=0 // pred_check
    _
  $region7: #{rnn_forward.1} parent=0 // pred_check_branch
    %18 = sbr.rel (0) target = $region9
  $region8: #{rnn_forward.1} parent=0 // pred_region
    _
  $region9: #{rnn_forward.1} parent=0 // pred_fallthru
    _
  // Predicated region
  $region10: #{rnn_forward.1} parent=0 // pred_check
    _
  $region11: #{rnn_forward.1} parent=0 // pred_check_branch
    %20 = sbr.rel (0) target = $region13
  $region12: #{rnn_forward.1} parent=0 // pred_region
    _
  $region13: #{rnn_forward.1} parent=0 // pred_fallthru
    _
  // Predicated region
  $region14: #{rnn_forward.1} parent=0 // pred_check
    _
  $region15: #{rnn_forward.1} parent=0 // pred_check_branch
    %22 = sbr.rel (0) target = $region17
  $region16: #{rnn_forward.1} parent=0 // pred_region
    _
  $region17: #{rnn_forward.1} parent=0 // pred_fallthru
    _
  // Predicated region
  $region18: #{rnn_forward.1} parent=0 // pred_check
    _
  $region19: #{rnn_forward.1} parent=0 // pred_check_branch
    %24 = sbr.rel (0) target = $region21
  $region20: #{rnn_forward.1} parent=0 // pred_region
    _
  $region21: #{rnn_forward.1} parent=0 // pred_fallthru
    _
  // Predicated region
  $region22: #{rnn_forward.1} parent=0 // pred_check
    _
  $region23: #{rnn_forward.1} parent=0 // pred_check_branch
    %26 = sbr.rel (0) target = $region25
  $region24: #{rnn_forward.1} parent=0 // pred_region
    _
  $region25: #{rnn_forward.1} parent=0 // pred_fallthru
    _
  // Predicated region
  $region26: #{rnn_forward.1} parent=0 // pred_check
    _
  $region27: #{rnn_forward.1} parent=0 // pred_check_branch
    %28 = sbr.rel (0) target = $region29
  $region28: #{rnn_forward.1} parent=0 // pred_region
    _
  $region29: #{rnn_forward.1} parent=0 // pred_fallthru
    _
  // Predicated region
  $region30: #{rnn_forward.1} parent=0 // pred_check
    _
  $region31: #{rnn_forward.1} parent=0 // pred_check_branch
    %30 = sbr.rel (0) target = $region33
  $region32: #{rnn_forward.1} parent=0 // pred_region
    _
  $region33: #{rnn_forward.1} parent=0 // pred_fallthru
    _
  %v31 = vld [vmem:[%s0] sm:$0xff]
  %v32 = vld [vmem:[%s0 + $0x8] sm:$0xff]
  %v33 = vlaneseq
  %v34 = vand.u32 %v33, 127
  %35 = vset.pattern.permute.xlu0 0
  %36 = vperm.xlu0 %35, %v31
  %v37 = vpop.permute.xlu0 %36
  %38 = vset.pattern.permute.xlu0 0
  %39 = vperm.xlu0 %38, %v32
  %v40 = vpop.permute.xlu0 %39
  %vm41 = vcmp.eq.s32.totalorder %v34, %v37
  %vm42 = vcmp.eq.s32.totalorder %v34, %v40
  %v43 = vsel %vm41, 1, 0
  %v44 = vsel %vm42, 1, 0
  %v45 = vcvt.s32.f32 %v43
  %v46 = vcvt.s32.f32 %v44
  %v47 = vld [vmem:[%s1] sm:$0xff]
  %v48 = vld [vmem:[%s1 + $0x8] sm:$0xff]
  %v49 = vld [vmem:[%s1 + $0x10] sm:$0xff]
  %v50 = vld [vmem:[%s1 + $0x18] sm:$0xff]
  %v51 = vld [vmem:[%s1 + $0x20] sm:$0xff]
  %v52 = vld [vmem:[%s1 + $0x28] sm:$0xff]
  %v53 = vld [vmem:[%s1 + $0x30] sm:$0x3]
  %vm54 = vcmask 408576
  %v56 = vsel %vm54, %v45, 0
  %v59 = vsel %vm54, %v46, 0
  %vm61 = vcmask 1041408
  %v63 = vsel %vm61, %v53, 0
  %65 = vmatprep.subr.mxu0 0.0
  %66 = vmatpush1.msra.mxu0 %v47
  %67 = vmatprep.subr.mxu0 0.0
  %68 = vmatpush1.msra.mxu0 %v48
  %69 = vmatprep.subr.mxu0 0.0
  %70 = vmatpush1.msra.mxu0 %v49
  %71 = vmatprep.subr.mxu0 0.0
  %72 = vmatpush1.msra.mxu0 %v50
  %73 = vmatprep.subr.mxu0 0.0
  %74 = vmatpush1.msra.mxu0 %v51
  %75 = vmatprep.subr.mxu0 0.0
  %76 = vmatpush1.msra.mxu0 %v52
  %77 = vmatprep.subr.mxu0 0.0
  %78 = vmatpush1.msra.mxu0 %v63
  %79 = vmatprep.subr.mxu0 0.0
  %80 = vmatpush1.msra.mxu0 0.0
  %81 = vmatprep.subr.mxu0 0.0
  %82 = vmatpush1.msra.mxu0 0.0
  %83 = vmatprep.subr.mxu0 0.0
  %84 = vmatpush1.msra.mxu0 0.0
  %85 = vmatprep.subr.mxu0 0.0
  %86 = vmatpush1.msra.mxu0 0.0
  %87 = vmatprep.subr.mxu0 0.0
  %88 = vmatpush1.msra.mxu0 0.0
  %89 = vmatprep.subr.mxu0 0.0
  %90 = vmatpush1.msra.mxu0 0.0
  %91 = vmatprep.subr.mxu0 0.0
  %92 = vmatpush1.msra.mxu0 0.0
  %93 = vmatprep.subr.mxu0 0.0
  %94 = vmatpush1.msra.mxu0 0.0
  %95 = vmatprep.subr.mxu0 0.0
  %96 = vmatpush1.msra.mxu0 0.0
  %97 = vmatprep.subr.mxu0 0.0
  %98 = vmatpush1.msra.mxu0 0.0
  %99 = vmatprep.subr.mxu0 0.0
  %100 = vmatpush1.msra.mxu0 0.0
  %101 = vmatprep.subr.mxu0 0.0
  %102 = vmatpush1.msra.mxu0 0.0
  %103 = vmatprep.subr.mxu0 0.0
  %104 = vmatpush1.msra.mxu0 0.0
  %105 = vmatprep.subr.mxu0 0.0
  %106 = vmatpush1.msra.mxu0 0.0
  %107 = vmatprep.subr.mxu0 0.0
  %108 = vmatpush1.msra.mxu0 0.0
  %109 = vmatprep.subr.mxu0 0.0
  %110 = vmatpush1.msra.mxu0 0.0
  %111 = vmatprep.subr.mxu0 0.0
  %112 = vmatpush1.msra.mxu0 0.0
  %113 = vmatprep.subr.mxu0 0.0
  %114 = vmatpush1.msra.mxu0 0.0
  %115 = vmatprep.subr.mxu0 0.0
  %116 = vmatpush1.msra.mxu0 0.0
  %117 = vmatprep.subr.mxu0 0.0
  %118 = vmatpush1.msra.mxu0 0.0
  %119 = vmatprep.subr.mxu0 0.0
  %120 = vmatpush1.msra.mxu0 0.0
  %121 = vmatprep.subr.mxu0 0.0
  %122 = vmatpush1.msra.mxu0 0.0
  %123 = vmatprep.subr.mxu0 0.0
  %124 = vmatpush1.msra.mxu0 0.0
  %125 = vmatprep.subr.mxu0 0.0
  %126 = vmatpush1.msra.mxu0 0.0
  %127 = vmatprep.subr.mxu0 0.0
  %128 = vmatpush1.msra.mxu0 0.0
  %129 = vmatprep.mubr.f32.mxu0 0.0
  %130 = vmatmul.mubr.f32.gmra.mrb[0].mxu0 %v56
  %v131 = vpop.f32.mrb[0].mxu0
  %v132 = vadd.f32 0.0, %v131
  %v133 = vpop.f32.mrb[0].mxu0
  %134 = vmatprep.mubr.f32.mxu0 0.0
  %135 = vmatmul.mubr.f32.gmra.mrb[0].mxu0 %v59
  %v136 = vpop.f32.mrb[0].mxu0
  %v137 = vadd.f32 0.0, %v136
  %v138 = vpop.f32.mrb[0].mxu0
  %139 = vdwg.mxu0
  %v140 = vld [vmem:[%s2] sm:$0xff]
  %v141 = vld [vmem:[%s2 + $0x8] sm:$0xff]
  %v142 = vld [vmem:[%s3] sm:$0x1]
  %v144 = vlaneseq
  %v145 = vshrl.u32 %v144, 7
  %v146 = vsub.s32 0, %v145
  %v147 = vrot.slane %v142, %v146
  %vm149 = vcmask 130048
  %v151 = vsel %vm149, %v132, 0
  %v154 = vsel %vm149, %v137, 0
  %156 = vmatprep.subr.mxu0 0.0
  %157 = vmatpush1.msra.mxu0 %v140
  %158 = vmatprep.subr.mxu0 0.0
  %159 = vmatpush1.msra.mxu0 %v141
  %160 = vmatprep.subr.mxu0 0.0
  %161 = vmatpush1.msra.mxu0 0.0
  %162 = vmatprep.subr.mxu0 0.0
  %163 = vmatpush1.msra.mxu0 0.0
  %164 = vmatprep.subr.mxu0 0.0
  %165 = vmatpush1.msra.mxu0 0.0
  %166 = vmatprep.subr.mxu0 0.0
  %167 = vmatpush1.msra.mxu0 0.0
  %168 = vmatprep.subr.mxu0 0.0
  %169 = vmatpush1.msra.mxu0 0.0
  %170 = vmatprep.subr.mxu0 0.0
  %171 = vmatpush1.msra.mxu0 0.0
  %172 = vmatprep.subr.mxu0 0.0
  %173 = vmatpush1.msra.mxu0 0.0
  %174 = vmatprep.subr.mxu0 0.0
  %175 = vmatpush1.msra.mxu0 0.0
  %176 = vmatprep.subr.mxu0 0.0
  %177 = vmatpush1.msra.mxu0 0.0
  %178 = vmatprep.subr.mxu0 0.0
  %179 = vmatpush1.msra.mxu0 0.0
  %180 = vmatprep.subr.mxu0 0.0
  %181 = vmatpush1.msra.mxu0 0.0
  %182 = vmatprep.subr.mxu0 0.0
  %183 = vmatpush1.msra.mxu0 0.0
  %184 = vmatprep.subr.mxu0 0.0
  %185 = vmatpush1.msra.mxu0 0.0
  %186 = vmatprep.subr.mxu0 0.0
  %187 = vmatpush1.msra.mxu0 0.0
  %188 = vmatprep.subr.mxu0 0.0
  %189 = vmatpush1.msra.mxu0 0.0
  %190 = vmatprep.subr.mxu0 0.0
  %191 = vmatpush1.msra.mxu0 0.0
  %192 = vmatprep.subr.mxu0 0.0
  %193 = vmatpush1.msra.mxu0 0.0
  %194 = vmatprep.subr.mxu0 0.0
  %195 = vmatpush1.msra.mxu0 0.0
  %196 = vmatprep.subr.mxu0 0.0
  %197 = vmatpush1.msra.mxu0 0.0
  %198 = vmatprep.subr.mxu0 0.0
  %199 = vmatpush1.msra.mxu0 0.0
  %200 = vmatprep.subr.mxu0 0.0
  %201 = vmatpush1.msra.mxu0 0.0
  %202 = vmatprep.subr.mxu0 0.0
  %203 = vmatpush1.msra.mxu0 0.0
  %204 = vmatprep.subr.mxu0 0.0
  %205 = vmatpush1.msra.mxu0 0.0
  %206 = vmatprep.subr.mxu0 0.0
  %207 = vmatpush1.msra.mxu0 0.0
  %208 = vmatprep.subr.mxu0 0.0
  %209 = vmatpush1.msra.mxu0 0.0
  %210 = vmatprep.subr.mxu0 0.0
  %211 = vmatpush1.msra.mxu0 0.0
  %212 = vmatprep.subr.mxu0 0.0
  %213 = vmatpush1.msra.mxu0 0.0
  %214 = vmatprep.subr.mxu0 0.0
  %215 = vmatpush1.msra.mxu0 0.0
  %216 = vmatprep.subr.mxu0 0.0
  %217 = vmatpush1.msra.mxu0 0.0
  %218 = vmatprep.subr.mxu0 0.0
  %219 = vmatpush1.msra.mxu0 0.0
  %220 = vmatprep.mubr.f32.mxu0 0.0
  %221 = vmatmul.mubr.f32.gmra.mrb[0].mxu0 %v151
  %v222 = vpop.f32.mrb[0].mxu0
  %v223 = vadd.f32 %v147, %v222
  %v224 = vpop.f32.mrb[0].mxu0
  %225 = vmatprep.mubr.f32.mxu0 0.0
  %226 = vmatmul.mubr.f32.gmra.mrb[0].mxu0 %v154
  %v227 = vpop.f32.mrb[0].mxu0
  %v228 = vadd.f32 %v147, %v227
  %v229 = vpop.f32.mrb[0].mxu0
  %230 = vdwg.mxu0
  %v231 = vld [vmem:[%s4] sm:$0xff]
  %v232 = vld [vmem:[%s4 + $0x8] sm:$0xff]
  %v233 = vld [vmem:[%s4 + $0x10] sm:$0xff]
  %v234 = vld [vmem:[%s4 + $0x18] sm:$0xff]
  %v235 = vld [vmem:[%s5] sm:$0xff]
  %v236 = vld [vmem:[%s5 + $0x8] sm:$0xff]
  %v237 = vld [vmem:[%s5 + $0x10] sm:$0xff]
  %v238 = vld [vmem:[%s5 + $0x18] sm:$0xff]
  %vm239 = vcmask 261120
  %v241 = vsel %vm239, 0.0, 0
  %243 = vmatprep.subr.mxu0 0.0
  %244 = vmatpush1.msra.mxu0 %v231
  %245 = vmatprep.subr.mxu0 0.0
  %246 = vmatpush1.msra.mxu0 %v232
  %247 = vmatprep.subr.mxu0 0.0
  %248 = vmatpush1.msra.mxu0 %v233
  %249 = vmatprep.subr.mxu0 0.0
  %250 = vmatpush1.msra.mxu0 %v234
  %251 = vmatprep.subr.mxu0 0.0
  %252 = vmatpush1.msra.mxu0 0.0
  %253 = vmatprep.subr.mxu0 0.0
  %254 = vmatpush1.msra.mxu0 0.0
  %255 = vmatprep.subr.mxu0 0.0
  %256 = vmatpush1.msra.mxu0 0.0
  %257 = vmatprep.subr.mxu0 0.0
  %258 = vmatpush1.msra.mxu0 0.0
  %259 = vmatprep.subr.mxu0 0.0
  %260 = vmatpush1.msra.mxu0 0.0
  %261 = vmatprep.subr.mxu0 0.0
  %262 = vmatpush1.msra.mxu0 0.0
  %263 = vmatprep.subr.mxu0 0.0
  %264 = vmatpush1.msra.mxu0 0.0
  %265 = vmatprep.subr.mxu0 0.0
  %266 = vmatpush1.msra.mxu0 0.0
  %267 = vmatprep.subr.mxu0 0.0
  %268 = vmatpush1.msra.mxu0 0.0
  %269 = vmatprep.subr.mxu0 0.0
  %270 = vmatpush1.msra.mxu0 0.0
  %271 = vmatprep.subr.mxu0 0.0
  %272 = vmatpush1.msra.mxu0 0.0
  %273 = vmatprep.subr.mxu0 0.0
  %274 = vmatpush1.msra.mxu0 0.0
  %275 = vmatprep.subr.mxu0 0.0
  %276 = vmatpush1.msra.mxu0 0.0
  %277 = vmatprep.subr.mxu0 0.0
  %278 = vmatpush1.msra.mxu0 0.0
  %279 = vmatprep.subr.mxu0 0.0
  %280 = vmatpush1.msra.mxu0 0.0
  %281 = vmatprep.subr.mxu0 0.0
  %282 = vmatpush1.msra.mxu0 0.0
  %283 = vmatprep.subr.mxu0 0.0
  %284 = vmatpush1.msra.mxu0 0.0
  %285 = vmatprep.subr.mxu0 0.0
  %286 = vmatpush1.msra.mxu0 0.0
  %287 = vmatprep.subr.mxu0 0.0
  %288 = vmatpush1.msra.mxu0 0.0
  %289 = vmatprep.subr.mxu0 0.0
  %290 = vmatpush1.msra.mxu0 0.0
  %291 = vmatprep.subr.mxu0 0.0
  %292 = vmatpush1.msra.mxu0 0.0
  %293 = vmatprep.subr.mxu0 0.0
  %294 = vmatpush1.msra.mxu0 0.0
  %295 = vmatprep.subr.mxu0 0.0
  %296 = vmatpush1.msra.mxu0 0.0
  %297 = vmatprep.subr.mxu0 0.0
  %298 = vmatpush1.msra.mxu0 0.0
  %299 = vmatprep.subr.mxu0 0.0
  %300 = vmatpush1.msra.mxu0 0.0
  %301 = vmatprep.subr.mxu0 0.0
  %302 = vmatpush1.msra.mxu0 0.0
  %303 = vmatprep.subr.mxu0 0.0
  %304 = vmatpush1.msra.mxu0 0.0
  %305 = vmatprep.subr.mxu0 0.0
  %306 = vmatpush1.msra.mxu0 0.0
  %307 = vmatprep.mubr.f32.mxu0 0.0
  %308 = vmatmul.mubr.f32.gmra.mrb[0].mxu0 %v241
  %v309 = vpop.f32.mrb[0].mxu0
  %v310 = vadd.f32 0.0, %v309
  %v311 = vpop.f32.mrb[0].mxu0
  %312 = vdwg.mxu0
  %v313 = vadd.f32 %v223, %v310
  %v314 = vtanh.pop %v313
  %315 = vmatprep.subr.mxu0 0.0
  %316 = vmatpush1.msra.mxu0 %v235
  %317 = vmatprep.subr.mxu0 0.0
  %318 = vmatpush1.msra.mxu0 %v236
  %319 = vmatprep.subr.mxu0 0.0
  %320 = vmatpush1.msra.mxu0 %v237
  %321 = vmatprep.subr.mxu0 0.0
  %322 = vmatpush1.msra.mxu0 %v238
  %323 = vmatprep.subr.mxu0 0.0
  %324 = vmatpush1.msra.mxu0 0.0
  %325 = vmatprep.subr.mxu0 0.0
  %326 = vmatpush1.msra.mxu0 0.0
  %327 = vmatprep.subr.mxu0 0.0
  %328 = vmatpush1.msra.mxu0 0.0
  %329 = vmatprep.subr.mxu0 0.0
  %330 = vmatpush1.msra.mxu0 0.0
  %331 = vmatprep.subr.mxu0 0.0
  %332 = vmatpush1.msra.mxu0 0.0
  %333 = vmatprep.subr.mxu0 0.0
  %334 = vmatpush1.msra.mxu0 0.0
  %335 = vmatprep.subr.mxu0 0.0
  %336 = vmatpush1.msra.mxu0 0.0
  %337 = vmatprep.subr.mxu0 0.0
  %338 = vmatpush1.msra.mxu0 0.0
  %339 = vmatprep.subr.mxu0 0.0
  %340 = vmatpush1.msra.mxu0 0.0
  %341 = vmatprep.subr.mxu0 0.0
  %342 = vmatpush1.msra.mxu0 0.0
  %343 = vmatprep.subr.mxu0 0.0
  %344 = vmatpush1.msra.mxu0 0.0
  %345 = vmatprep.subr.mxu0 0.0
  %346 = vmatpush1.msra.mxu0 0.0
  %347 = vmatprep.subr.mxu0 0.0
  %348 = vmatpush1.msra.mxu0 0.0
  %349 = vmatprep.subr.mxu0 0.0
  %350 = vmatpush1.msra.mxu0 0.0
  %351 = vmatprep.subr.mxu0 0.0
  %352 = vmatpush1.msra.mxu0 0.0
  %353 = vmatprep.subr.mxu0 0.0
  %354 = vmatpush1.msra.mxu0 0.0
  %355 = vmatprep.subr.mxu0 0.0
  %356 = vmatpush1.msra.mxu0 0.0
  %357 = vmatprep.subr.mxu0 0.0
  %358 = vmatpush1.msra.mxu0 0.0
  %359 = vmatprep.subr.mxu0 0.0
  %360 = vmatpush1.msra.mxu0 0.0
  %361 = vmatprep.subr.mxu0 0.0
  %362 = vmatpush1.msra.mxu0 0.0
  %363 = vmatprep.subr.mxu0 0.0
  %364 = vmatpush1.msra.mxu0 0.0
  %365 = vmatprep.subr.mxu0 0.0
  %366 = vmatpush1.msra.mxu0 0.0
  %367 = vmatprep.subr.mxu0 0.0
  %368 = vmatpush1.msra.mxu0 0.0
  %369 = vmatprep.subr.mxu0 0.0
  %370 = vmatpush1.msra.mxu0 0.0
  %371 = vmatprep.subr.mxu0 0.0
  %372 = vmatpush1.msra.mxu0 0.0
  %373 = vmatprep.subr.mxu0 0.0
  %374 = vmatpush1.msra.mxu0 0.0
  %375 = vmatprep.subr.mxu0 0.0
  %376 = vmatpush1.msra.mxu0 0.0
  %377 = vmatprep.subr.mxu0 0.0
  %378 = vmatpush1.msra.mxu0 0.0
  %379 = vmatprep.mubr.f32.mxu0 0.0
  %380 = vmatmul.mubr.f32.gmra.mrb[0].mxu0 %v241
  %v381 = vpop.f32.mrb[0].mxu0
  %v382 = vadd.f32 0.0, %v381
  %v383 = vpop.f32.mrb[0].mxu0
  %384 = vdwg.mxu0
  %v386 = vrot.slane %v382, 2
  %387 = vrot.lane.b32.xlu0 %v386, 32
  %v388 = vpop.permute.xlu0 %387
  %v390 = vadd.f32 %v228, %v388
  %v391 = vtanh.pop %v390
  %v392 = vadd.f32 %v314, 0.0
  %v393 = vadd.f32 %v391, 0.0
  %v395 = vsel %vm239, %v314, 0
  %397 = vmatprep.subr.mxu0 0.0
  %398 = vmatpush1.msra.mxu0 %v231
  %399 = vmatprep.subr.mxu0 0.0
  %400 = vmatpush1.msra.mxu0 %v232
  %401 = vmatprep.subr.mxu0 0.0
  %402 = vmatpush1.msra.mxu0 %v233
  %403 = vmatprep.subr.mxu0 0.0
  %404 = vmatpush1.msra.mxu0 %v234
  %405 = vmatprep.subr.mxu0 0.0
  %406 = vmatpush1.msra.mxu0 0.0
  %407 = vmatprep.subr.mxu0 0.0
  %408 = vmatpush1.msra.mxu0 0.0
  %409 = vmatprep.subr.mxu0 0.0
  %410 = vmatpush1.msra.mxu0 0.0
  %411 = vmatprep.subr.mxu0 0.0
  %412 = vmatpush1.msra.mxu0 0.0
  %413 = vmatprep.subr.mxu0 0.0
  %414 = vmatpush1.msra.mxu0 0.0
  %415 = vmatprep.subr.mxu0 0.0
  %416 = vmatpush1.msra.mxu0 0.0
  %417 = vmatprep.subr.mxu0 0.0
  %418 = vmatpush1.msra.mxu0 0.0
  %419 = vmatprep.subr.mxu0 0.0
  %420 = vmatpush1.msra.mxu0 0.0
  %421 = vmatprep.subr.mxu0 0.0
  %422 = vmatpush1.msra.mxu0 0.0
  %423 = vmatprep.subr.mxu0 0.0
  %424 = vmatpush1.msra.mxu0 0.0
  %425 = vmatprep.subr.mxu0 0.0
  %426 = vmatpush1.msra.mxu0 0.0
  %427 = vmatprep.subr.mxu0 0.0
  %428 = vmatpush1.msra.mxu0 0.0
  %429 = vmatprep.subr.mxu0 0.0
  %430 = vmatpush1.msra.mxu0 0.0
  %431 = vmatprep.subr.mxu0 0.0
  %432 = vmatpush1.msra.mxu0 0.0
  %433 = vmatprep.subr.mxu0 0.0
  %434 = vmatpush1.msra.mxu0 0.0
  %435 = vmatprep.subr.mxu0 0.0
  %436 = vmatpush1.msra.mxu0 0.0
  %437 = vmatprep.subr.mxu0 0.0
  %438 = vmatpush1.msra.mxu0 0.0
  %439 = vmatprep.subr.mxu0 0.0
  %440 = vmatpush1.msra.mxu0 0.0
  %441 = vmatprep.subr.mxu0 0.0
  %442 = vmatpush1.msra.mxu0 0.0
  %443 = vmatprep.subr.mxu0 0.0
  %444 = vmatpush1.msra.mxu0 0.0
  %445 = vmatprep.subr.mxu0 0.0
  %446 = vmatpush1.msra.mxu0 0.0
  %447 = vmatprep.subr.mxu0 0.0
  %448 = vmatpush1.msra.mxu0 0.0
  %449 = vmatprep.subr.mxu0 0.0
  %450 = vmatpush1.msra.mxu0 0.0
  %451 = vmatprep.subr.mxu0 0.0
  %452 = vmatpush1.msra.mxu0 0.0
  %453 = vmatprep.subr.mxu0 0.0
  %454 = vmatpush1.msra.mxu0 0.0
  %455 = vmatprep.subr.mxu0 0.0
  %456 = vmatpush1.msra.mxu0 0.0
  %457 = vmatprep.subr.mxu0 0.0
  %458 = vmatpush1.msra.mxu0 0.0
  %459 = vmatprep.subr.mxu0 0.0
  %460 = vmatpush1.msra.mxu0 0.0
  %461 = vmatprep.mubr.f32.mxu0 0.0
  %462 = vmatmul.mubr.f32.gmra.mrb[0].mxu0 %v395
  %v463 = vpop.f32.mrb[0].mxu0
  %v464 = vadd.f32 0.0, %v463
  %v465 = vpop.f32.mrb[0].mxu0
  %466 = vdwg.mxu0
  %v468 = vrot.slane %v464, 6
  %v470 = vadd.f32 %v223, %v468
  %v471 = vtanh.pop %v470
  %v473 = vrot.slane %v391, 6
  %474 = vrot.lane.b32.xlu0 %v473, 96
  %v475 = vpop.permute.xlu0 %474
  %v476 = vsel %vm239, %v475, 0
  %478 = vmatprep.subr.mxu0 0.0
  %479 = vmatpush1.msra.mxu0 %v235
  %480 = vmatprep.subr.mxu0 0.0
  %481 = vmatpush1.msra.mxu0 %v236
  %482 = vmatprep.subr.mxu0 0.0
  %483 = vmatpush1.msra.mxu0 %v237
  %484 = vmatprep.subr.mxu0 0.0
  %485 = vmatpush1.msra.mxu0 %v238
  %486 = vmatprep.subr.mxu0 0.0
  %487 = vmatpush1.msra.mxu0 0.0
  %488 = vmatprep.subr.mxu0 0.0
  %489 = vmatpush1.msra.mxu0 0.0
  %490 = vmatprep.subr.mxu0 0.0
  %491 = vmatpush1.msra.mxu0 0.0
  %492 = vmatprep.subr.mxu0 0.0
  %493 = vmatpush1.msra.mxu0 0.0
  %494 = vmatprep.subr.mxu0 0.0
  %495 = vmatpush1.msra.mxu0 0.0
  %496 = vmatprep.subr.mxu0 0.0
  %497 = vmatpush1.msra.mxu0 0.0
  %498 = vmatprep.subr.mxu0 0.0
  %499 = vmatpush1.msra.mxu0 0.0
  %500 = vmatprep.subr.mxu0 0.0
  %501 = vmatpush1.msra.mxu0 0.0
  %502 = vmatprep.subr.mxu0 0.0
  %503 = vmatpush1.msra.mxu0 0.0
  %504 = vmatprep.subr.mxu0 0.0
  %505 = vmatpush1.msra.mxu0 0.0
  %506 = vmatprep.subr.mxu0 0.0
  %507 = vmatpush1.msra.mxu0 0.0
  %508 = vmatprep.subr.mxu0 0.0
  %509 = vmatpush1.msra.mxu0 0.0
  %510 = vmatprep.subr.mxu0 0.0
  %511 = vmatpush1.msra.mxu0 0.0
  %512 = vmatprep.subr.mxu0 0.0
  %513 = vmatpush1.msra.mxu0 0.0
  %514 = vmatprep.subr.mxu0 0.0
  %515 = vmatpush1.msra.mxu0 0.0
  %516 = vmatprep.subr.mxu0 0.0
  %517 = vmatpush1.msra.mxu0 0.0
  %518 = vmatprep.subr.mxu0 0.0
  %519 = vmatpush1.msra.mxu0 0.0
  %520 = vmatprep.subr.mxu0 0.0
  %521 = vmatpush1.msra.mxu0 0.0
  %522 = vmatprep.subr.mxu0 0.0
  %523 = vmatpush1.msra.mxu0 0.0
  %524 = vmatprep.subr.mxu0 0.0
  %525 = vmatpush1.msra.mxu0 0.0
  %526 = vmatprep.subr.mxu0 0.0
  %527 = vmatpush1.msra.mxu0 0.0
  %528 = vmatprep.subr.mxu0 0.0
  %529 = vmatpush1.msra.mxu0 0.0
  %530 = vmatprep.subr.mxu0 0.0
  %531 = vmatpush1.msra.mxu0 0.0
  %532 = vmatprep.subr.mxu0 0.0
  %533 = vmatpush1.msra.mxu0 0.0
  %534 = vmatprep.subr.mxu0 0.0
  %535 = vmatpush1.msra.mxu0 0.0
  %536 = vmatprep.subr.mxu0 0.0
  %537 = vmatpush1.msra.mxu0 0.0
  %538 = vmatprep.subr.mxu0 0.0
  %539 = vmatpush1.msra.mxu0 0.0
  %540 = vmatprep.subr.mxu0 0.0
  %541 = vmatpush1.msra.mxu0 0.0
  %542 = vmatprep.mubr.f32.mxu0 0.0
  %543 = vmatmul.mubr.f32.gmra.mrb[0].mxu0 %v476
  %v544 = vpop.f32.mrb[0].mxu0
  %v545 = vadd.f32 0.0, %v544
  %v546 = vpop.f32.mrb[0].mxu0
  %547 = vdwg.mxu0
  %v549 = vrot.slane %v545, 4
  %550 = vrot.lane.b32.xlu0 %v549, 32
  %v551 = vpop.permute.xlu0 %550
  %v553 = vadd.f32 %v228, %v551
  %v554 = vtanh.pop %v553
  %v556 = vrot.slane %v471, 2
  %v558 = vadd.f32 %v392, %v556
  %v560 = vrot.slane %v554, 6
  %v562 = vadd.f32 %v393, %v560
  %v563 = vsel %vm239, %v556, 0
  %565 = vmatprep.subr.mxu0 0.0
  %566 = vmatpush1.msra.mxu0 %v231
  %567 = vmatprep.subr.mxu0 0.0
  %568 = vmatpush1.msra.mxu0 %v232
  %569 = vmatprep.subr.mxu0 0.0
  %570 = vmatpush1.msra.mxu0 %v233
  %571 = vmatprep.subr.mxu0 0.0
  %572 = vmatpush1.msra.mxu0 %v234
  %573 = vmatprep.subr.mxu0 0.0
  %574 = vmatpush1.msra.mxu0 0.0
  %575 = vmatprep.subr.mxu0 0.0
  %576 = vmatpush1.msra.mxu0 0.0
  %577 = vmatprep.subr.mxu0 0.0
  %578 = vmatpush1.msra.mxu0 0.0
  %579 = vmatprep.subr.mxu0 0.0
  %580 = vmatpush1.msra.mxu0 0.0
  %581 = vmatprep.subr.mxu0 0.0
  %582 = vmatpush1.msra.mxu0 0.0
  %583 = vmatprep.subr.mxu0 0.0
  %584 = vmatpush1.msra.mxu0 0.0
  %585 = vmatprep.subr.mxu0 0.0
  %586 = vmatpush1.msra.mxu0 0.0
  %587 = vmatprep.subr.mxu0 0.0
  %588 = vmatpush1.msra.mxu0 0.0
  %589 = vmatprep.subr.mxu0 0.0
  %590 = vmatpush1.msra.mxu0 0.0
  %591 = vmatprep.subr.mxu0 0.0
  %592 = vmatpush1.msra.mxu0 0.0
  %593 = vmatprep.subr.mxu0 0.0
  %594 = vmatpush1.msra.mxu0 0.0
  %595 = vmatprep.subr.mxu0 0.0
  %596 = vmatpush1.msra.mxu0 0.0
  %597 = vmatprep.subr.mxu0 0.0
  %598 = vmatpush1.msra.mxu0 0.0
  %599 = vmatprep.subr.mxu0 0.0
  %600 = vmatpush1.msra.mxu0 0.0
  %601 = vmatprep.subr.mxu0 0.0
  %602 = vmatpush1.msra.mxu0 0.0
  %603 = vmatprep.subr.mxu0 0.0
  %604 = vmatpush1.msra.mxu0 0.0
  %605 = vmatprep.subr.mxu0 0.0
  %606 = vmatpush1.msra.mxu0 0.0
  %607 = vmatprep.subr.mxu0 0.0
  %608 = vmatpush1.msra.mxu0 0.0
  %609 = vmatprep.subr.mxu0 0.0
  %610 = vmatpush1.msra.mxu0 0.0
  %611 = vmatprep.subr.mxu0 0.0
  %612 = vmatpush1.msra.mxu0 0.0
  %613 = vmatprep.subr.mxu0 0.0
  %614 = vmatpush1.msra.mxu0 0.0
  %615 = vmatprep.subr.mxu0 0.0
  %616 = vmatpush1.msra.mxu0 0.0
  %617 = vmatprep.subr.mxu0 0.0
  %618 = vmatpush1.msra.mxu0 0.0
  %619 = vmatprep.subr.mxu0 0.0
  %620 = vmatpush1.msra.mxu0 0.0
  %621 = vmatprep.subr.mxu0 0.0
  %622 = vmatpush1.msra.mxu0 0.0
  %623 = vmatprep.subr.mxu0 0.0
  %624 = vmatpush1.msra.mxu0 0.0
  %625 = vmatprep.subr.mxu0 0.0
  %626 = vmatpush1.msra.mxu0 0.0
  %627 = vmatprep.subr.mxu0 0.0
  %628 = vmatpush1.msra.mxu0 0.0
  %629 = vmatprep.mubr.f32.mxu0 0.0
  %630 = vmatmul.mubr.f32.gmra.mrb[0].mxu0 %v563
  %v631 = vpop.f32.mrb[0].mxu0
  %v632 = vadd.f32 0.0, %v631
  %v633 = vpop.f32.mrb[0].mxu0
  %634 = vdwg.mxu0
  %v636 = vrot.slane %v632, 4
  %v638 = vadd.f32 %v223, %v636
  %v639 = vtanh.pop %v638
  %v640 = vrot.slane %v554, 4
  %641 = vrot.lane.b32.xlu0 %v640, 96
  %v642 = vpop.permute.xlu0 %641
  %v643 = vsel %vm239, %v642, 0
  %645 = vmatprep.subr.mxu0 0.0
  %646 = vmatpush1.msra.mxu0 %v235
  %647 = vmatprep.subr.mxu0 0.0
  %648 = vmatpush1.msra.mxu0 %v236
  %649 = vmatprep.subr.mxu0 0.0
  %650 = vmatpush1.msra.mxu0 %v237
  %651 = vmatprep.subr.mxu0 0.0
  %652 = vmatpush1.msra.mxu0 %v238
  %653 = vmatprep.subr.mxu0 0.0
  %654 = vmatpush1.msra.mxu0 0.0
  %655 = vmatprep.subr.mxu0 0.0
  %656 = vmatpush1.msra.mxu0 0.0
  %657 = vmatprep.subr.mxu0 0.0
  %658 = vmatpush1.msra.mxu0 0.0
  %659 = vmatprep.subr.mxu0 0.0
  %660 = vmatpush1.msra.mxu0 0.0
  %661 = vmatprep.subr.mxu0 0.0
  %662 = vmatpush1.msra.mxu0 0.0
  %663 = vmatprep.subr.mxu0 0.0
  %664 = vmatpush1.msra.mxu0 0.0
  %665 = vmatprep.subr.mxu0 0.0
  %666 = vmatpush1.msra.mxu0 0.0
  %667 = vmatprep.subr.mxu0 0.0
  %668 = vmatpush1.msra.mxu0 0.0
  %669 = vmatprep.subr.mxu0 0.0
  %670 = vmatpush1.msra.mxu0 0.0
  %671 = vmatprep.subr.mxu0 0.0
  %672 = vmatpush1.msra.mxu0 0.0
  %673 = vmatprep.subr.mxu0 0.0
  %674 = vmatpush1.msra.mxu0 0.0
  %675 = vmatprep.subr.mxu0 0.0
  %676 = vmatpush1.msra.mxu0 0.0
  %677 = vmatprep.subr.mxu0 0.0
  %678 = vmatpush1.msra.mxu0 0.0
  %679 = vmatprep.subr.mxu0 0.0
  %680 = vmatpush1.msra.mxu0 0.0
  %681 = vmatprep.subr.mxu0 0.0
  %682 = vmatpush1.msra.mxu0 0.0
  %683 = vmatprep.subr.mxu0 0.0
  %684 = vmatpush1.msra.mxu0 0.0
  %685 = vmatprep.subr.mxu0 0.0
  %686 = vmatpush1.msra.mxu0 0.0
  %687 = vmatprep.subr.mxu0 0.0
  %688 = vmatpush1.msra.mxu0 0.0
  %689 = vmatprep.subr.mxu0 0.0
  %690 = vmatpush1.msra.mxu0 0.0
  %691 = vmatprep.subr.mxu0 0.0
  %692 = vmatpush1.msra.mxu0 0.0
  %693 = vmatprep.subr.mxu0 0.0
  %694 = vmatpush1.msra.mxu0 0.0
  %695 = vmatprep.subr.mxu0 0.0
  %696 = vmatpush1.msra.mxu0 0.0
  %697 = vmatprep.subr.mxu0 0.0
  %698 = vmatpush1.msra.mxu0 0.0
  %699 = vmatprep.subr.mxu0 0.0
  %700 = vmatpush1.msra.mxu0 0.0
  %701 = vmatprep.subr.mxu0 0.0
  %702 = vmatpush1.msra.mxu0 0.0
  %703 = vmatprep.subr.mxu0 0.0
  %704 = vmatpush1.msra.mxu0 0.0
  %705 = vmatprep.subr.mxu0 0.0
  %706 = vmatpush1.msra.mxu0 0.0
  %707 = vmatprep.subr.mxu0 0.0
  %708 = vmatpush1.msra.mxu0 0.0
  %709 = vmatprep.mubr.f32.mxu0 0.0
  %710 = vmatmul.mubr.f32.gmra.mrb[0].mxu0 %v643
  %v711 = vpop.f32.mrb[0].mxu0
  %v712 = vadd.f32 0.0, %v711
  %v713 = vpop.f32.mrb[0].mxu0
  %714 = vdwg.mxu0
  %v716 = vrot.slane %v712, 6
  %717 = vrot.lane.b32.xlu0 %v716, 32
  %v718 = vpop.permute.xlu0 %717
  %v720 = vadd.f32 %v228, %v718
  %v721 = vtanh.pop %v720
  %v723 = vrot.slane %v639, 4
  %v725 = vadd.f32 %v558, %v723
  %v727 = vrot.slane %v721, 4
  %v729 = vadd.f32 %v562, %v727
  %v730 = vsel %vm239, %v723, 0
  %732 = vmatprep.subr.mxu0 0.0
  %733 = vmatpush1.msra.mxu0 %v231
  %734 = vmatprep.subr.mxu0 0.0
  %735 = vmatpush1.msra.mxu0 %v232
  %736 = vmatprep.subr.mxu0 0.0
  %737 = vmatpush1.msra.mxu0 %v233
  %738 = vmatprep.subr.mxu0 0.0
  %739 = vmatpush1.msra.mxu0 %v234
  %740 = vmatprep.subr.mxu0 0.0
  %741 = vmatpush1.msra.mxu0 0.0
  %742 = vmatprep.subr.mxu0 0.0
  %743 = vmatpush1.msra.mxu0 0.0
  %744 = vmatprep.subr.mxu0 0.0
  %745 = vmatpush1.msra.mxu0 0.0
  %746 = vmatprep.subr.mxu0 0.0
  %747 = vmatpush1.msra.mxu0 0.0
  %748 = vmatprep.subr.mxu0 0.0
  %749 = vmatpush1.msra.mxu0 0.0
  %750 = vmatprep.subr.mxu0 0.0
  %751 = vmatpush1.msra.mxu0 0.0
  %752 = vmatprep.subr.mxu0 0.0
  %753 = vmatpush1.msra.mxu0 0.0
  %754 = vmatprep.subr.mxu0 0.0
  %755 = vmatpush1.msra.mxu0 0.0
  %756 = vmatprep.subr.mxu0 0.0
  %757 = vmatpush1.msra.mxu0 0.0
  %758 = vmatprep.subr.mxu0 0.0
  %759 = vmatpush1.msra.mxu0 0.0
  %760 = vmatprep.subr.mxu0 0.0
  %761 = vmatpush1.msra.mxu0 0.0
  %762 = vmatprep.subr.mxu0 0.0
  %763 = vmatpush1.msra.mxu0 0.0
  %764 = vmatprep.subr.mxu0 0.0
  %765 = vmatpush1.msra.mxu0 0.0
  %766 = vmatprep.subr.mxu0 0.0
  %767 = vmatpush1.msra.mxu0 0.0
  %768 = vmatprep.subr.mxu0 0.0
  %769 = vmatpush1.msra.mxu0 0.0
  %770 = vmatprep.subr.mxu0 0.0
  %771 = vmatpush1.msra.mxu0 0.0
  %772 = vmatprep.subr.mxu0 0.0
  %773 = vmatpush1.msra.mxu0 0.0
  %774 = vmatprep.subr.mxu0 0.0
  %775 = vmatpush1.msra.mxu0 0.0
  %776 = vmatprep.subr.mxu0 0.0
  %777 = vmatpush1.msra.mxu0 0.0
  %778 = vmatprep.subr.mxu0 0.0
  %779 = vmatpush1.msra.mxu0 0.0
  %780 = vmatprep.subr.mxu0 0.0
  %781 = vmatpush1.msra.mxu0 0.0
  %782 = vmatprep.subr.mxu0 0.0
  %783 = vmatpush1.msra.mxu0 0.0
  %784 = vmatprep.subr.mxu0 0.0
  %785 = vmatpush1.msra.mxu0 0.0
  %786 = vmatprep.subr.mxu0 0.0
  %787 = vmatpush1.msra.mxu0 0.0
  %788 = vmatprep.subr.mxu0 0.0
  %789 = vmatpush1.msra.mxu0 0.0
  %790 = vmatprep.subr.mxu0 0.0
  %791 = vmatpush1.msra.mxu0 0.0
  %792 = vmatprep.subr.mxu0 0.0
  %793 = vmatpush1.msra.mxu0 0.0
  %794 = vmatprep.subr.mxu0 0.0
  %795 = vmatpush1.msra.mxu0 0.0
  %796 = vmatprep.mubr.f32.mxu0 0.0
  %797 = vmatmul.mubr.f32.gmra.mrb[0].mxu0 %v730
  %v798 = vpop.f32.mrb[0].mxu0
  %v799 = vadd.f32 0.0, %v798
  %v800 = vpop.f32.mrb[0].mxu0
  %801 = vdwg.mxu0
  %v803 = vrot.slane %v799, 2
  %v805 = vadd.f32 %v223, %v803
  %v806 = vtanh.pop %v805
  %v807 = vrot.slane %v721, 2
  %808 = vrot.lane.b32.xlu0 %v807, 96
  %v809 = vpop.permute.xlu0 %808
  %v810 = vsel %vm239, %v809, 0
  %812 = vmatprep.subr.mxu0 0.0
  %813 = vmatpush1.msra.mxu0 %v235
  %814 = vmatprep.subr.mxu0 0.0
  %815 = vmatpush1.msra.mxu0 %v236
  %816 = vmatprep.subr.mxu0 0.0
  %817 = vmatpush1.msra.mxu0 %v237
  %818 = vmatprep.subr.mxu0 0.0
  %819 = vmatpush1.msra.mxu0 %v238
  %820 = vmatprep.subr.mxu0 0.0
  %821 = vmatpush1.msra.mxu0 0.0
  %822 = vmatprep.subr.mxu0 0.0
  %823 = vmatpush1.msra.mxu0 0.0
  %824 = vmatprep.subr.mxu0 0.0
  %825 = vmatpush1.msra.mxu0 0.0
  %826 = vmatprep.subr.mxu0 0.0
  %827 = vmatpush1.msra.mxu0 0.0
  %828 = vmatprep.subr.mxu0 0.0
  %829 = vmatpush1.msra.mxu0 0.0
  %830 = vmatprep.subr.mxu0 0.0
  %831 = vmatpush1.msra.mxu0 0.0
  %832 = vmatprep.subr.mxu0 0.0
  %833 = vmatpush1.msra.mxu0 0.0
  %834 = vmatprep.subr.mxu0 0.0
  %835 = vmatpush1.msra.mxu0 0.0
  %836 = vmatprep.subr.mxu0 0.0
  %837 = vmatpush1.msra.mxu0 0.0
  %838 = vmatprep.subr.mxu0 0.0
  %839 = vmatpush1.msra.mxu0 0.0
  %840 = vmatprep.subr.mxu0 0.0
  %841 = vmatpush1.msra.mxu0 0.0
  %842 = vmatprep.subr.mxu0 0.0
  %843 = vmatpush1.msra.mxu0 0.0
  %844 = vmatprep.subr.mxu0 0.0
  %845 = vmatpush1.msra.mxu0 0.0
  %846 = vmatprep.subr.mxu0 0.0
  %847 = vmatpush1.msra.mxu0 0.0
  %848 = vmatprep.subr.mxu0 0.0
  %849 = vmatpush1.msra.mxu0 0.0
  %850 = vmatprep.subr.mxu0 0.0
  %851 = vmatpush1.msra.mxu0 0.0
  %852 = vmatprep.subr.mxu0 0.0
  %853 = vmatpush1.msra.mxu0 0.0
  %854 = vmatprep.subr.mxu0 0.0
  %855 = vmatpush1.msra.mxu0 0.0
  %856 = vmatprep.subr.mxu0 0.0
  %857 = vmatpush1.msra.mxu0 0.0
  %858 = vmatprep.subr.mxu0 0.0
  %859 = vmatpush1.msra.mxu0 0.0
  %860 = vmatprep.subr.mxu0 0.0
  %861 = vmatpush1.msra.mxu0 0.0
  %862 = vmatprep.subr.mxu0 0.0
  %863 = vmatpush1.msra.mxu0 0.0
  %864 = vmatprep.subr.mxu0 0.0
  %865 = vmatpush1.msra.mxu0 0.0
  %866 = vmatprep.subr.mxu0 0.0
  %867 = vmatpush1.msra.mxu0 0.0
  %868 = vmatprep.subr.mxu0 0.0
  %869 = vmatpush1.msra.mxu0 0.0
  %870 = vmatprep.subr.mxu0 0.0
  %871 = vmatpush1.msra.mxu0 0.0
  %872 = vmatprep.subr.mxu0 0.0
  %873 = vmatpush1.msra.mxu0 0.0
  %874 = vmatprep.subr.mxu0 0.0
  %875 = vmatpush1.msra.mxu0 0.0
  %876 = vmatprep.mubr.f32.mxu0 0.0
  %877 = vmatmul.mubr.f32.gmra.mrb[0].mxu0 %v810
  %v878 = vpop.f32.mrb[0].mxu0
  %v879 = vadd.f32 0.0, %v878
  %v880 = vpop.f32.mrb[0].mxu0
  %881 = vdwg.mxu0
  %883 = vrot.lane.b32.xlu0 %v879, 32
  %v884 = vpop.permute.xlu0 %883
  %v886 = vadd.f32 %v228, %v884
  %v887 = vtanh.pop %v886
  %v889 = vrot.slane %v806, 6
  %v891 = vadd.f32 %v725, %v889
  %v893 = vrot.slane %v887, 2
  %v895 = vadd.f32 %v729, %v893
  %v896 = vsel %vm239, %v889, 0
  %898 = vmatprep.subr.mxu0 0.0
  %899 = vmatpush1.msra.mxu0 %v231
  %900 = vmatprep.subr.mxu0 0.0
  %901 = vmatpush1.msra.mxu0 %v232
  %902 = vmatprep.subr.mxu0 0.0
  %903 = vmatpush1.msra.mxu0 %v233
  %904 = vmatprep.subr.mxu0 0.0
  %905 = vmatpush1.msra.mxu0 %v234
  %906 = vmatprep.subr.mxu0 0.0
  %907 = vmatpush1.msra.mxu0 0.0
  %908 = vmatprep.subr.mxu0 0.0
  %909 = vmatpush1.msra.mxu0 0.0
  %910 = vmatprep.subr.mxu0 0.0
  %911 = vmatpush1.msra.mxu0 0.0
  %912 = vmatprep.subr.mxu0 0.0
  %913 = vmatpush1.msra.mxu0 0.0
  %914 = vmatprep.subr.mxu0 0.0
  %915 = vmatpush1.msra.mxu0 0.0
  %916 = vmatprep.subr.mxu0 0.0
  %917 = vmatpush1.msra.mxu0 0.0
  %918 = vmatprep.subr.mxu0 0.0
  %919 = vmatpush1.msra.mxu0 0.0
  %920 = vmatprep.subr.mxu0 0.0
  %921 = vmatpush1.msra.mxu0 0.0
  %922 = vmatprep.subr.mxu0 0.0
  %923 = vmatpush1.msra.mxu0 0.0
  %924 = vmatprep.subr.mxu0 0.0
  %925 = vmatpush1.msra.mxu0 0.0
  %926 = vmatprep.subr.mxu0 0.0
  %927 = vmatpush1.msra.mxu0 0.0
  %928 = vmatprep.subr.mxu0 0.0
  %929 = vmatpush1.msra.mxu0 0.0
  %930 = vmatprep.subr.mxu0 0.0
  %931 = vmatpush1.msra.mxu0 0.0
  %932 = vmatprep.subr.mxu0 0.0
  %933 = vmatpush1.msra.mxu0 0.0
  %934 = vmatprep.subr.mxu0 0.0
  %935 = vmatpush1.msra.mxu0 0.0
  %936 = vmatprep.subr.mxu0 0.0
  %937 = vmatpush1.msra.mxu0 0.0
  %938 = vmatprep.subr.mxu0 0.0
  %939 = vmatpush1.msra.mxu0 0.0
  %940 = vmatprep.subr.mxu0 0.0
  %941 = vmatpush1.msra.mxu0 0.0
  %942 = vmatprep.subr.mxu0 0.0
  %943 = vmatpush1.msra.mxu0 0.0
  %944 = vmatprep.subr.mxu0 0.0
  %945 = vmatpush1.msra.mxu0 0.0
  %946 = vmatprep.subr.mxu0 0.0
  %947 = vmatpush1.msra.mxu0 0.0
  %948 = vmatprep.subr.mxu0 0.0
  %949 = vmatpush1.msra.mxu0 0.0
  %950 = vmatprep.subr.mxu0 0.0
  %951 = vmatpush1.msra.mxu0 0.0
  %952 = vmatprep.subr.mxu0 0.0
  %953 = vmatpush1.msra.mxu0 0.0
  %954 = vmatprep.subr.mxu0 0.0
  %955 = vmatpush1.msra.mxu0 0.0
  %956 = vmatprep.subr.mxu0 0.0
  %957 = vmatpush1.msra.mxu0 0.0
  %958 = vmatprep.subr.mxu0 0.0
  %959 = vmatpush1.msra.mxu0 0.0
  %960 = vmatprep.subr.mxu0 0.0
  %961 = vmatpush1.msra.mxu0 0.0
  %962 = vmatprep.mubr.f32.mxu0 0.0
  %963 = vmatmul.mubr.f32.gmra.mrb[0].mxu0 %v896
  %v964 = vpop.f32.mrb[0].mxu0
  %v965 = vadd.f32 0.0, %v964
  %v966 = vpop.f32.mrb[0].mxu0
  %967 = vdwg.mxu0
  %v968 = vadd.f32 %v228, %v965
  %v969 = vtanh.pop %v968
  %970 = vrot.lane.b32.xlu0 %v887, 96
  %v971 = vpop.permute.xlu0 %970
  %v972 = vsel %vm239, %v971, 0
  %974 = vmatprep.subr.mxu0 0.0
  %975 = vmatpush1.msra.mxu0 %v235
  %976 = vmatprep.subr.mxu0 0.0
  %977 = vmatpush1.msra.mxu0 %v236
  %978 = vmatprep.subr.mxu0 0.0
  %979 = vmatpush1.msra.mxu0 %v237
  %980 = vmatprep.subr.mxu0 0.0
  %981 = vmatpush1.msra.mxu0 %v238
  %982 = vmatprep.subr.mxu0 0.0
  %983 = vmatpush1.msra.mxu0 0.0
  %984 = vmatprep.subr.mxu0 0.0
  %985 = vmatpush1.msra.mxu0 0.0
  %986 = vmatprep.subr.mxu0 0.0
  %987 = vmatpush1.msra.mxu0 0.0
  %988 = vmatprep.subr.mxu0 0.0
  %989 = vmatpush1.msra.mxu0 0.0
  %990 = vmatprep.subr.mxu0 0.0
  %991 = vmatpush1.msra.mxu0 0.0
  %992 = vmatprep.subr.mxu0 0.0
  %993 = vmatpush1.msra.mxu0 0.0
  %994 = vmatprep.subr.mxu0 0.0
  %995 = vmatpush1.msra.mxu0 0.0
  %996 = vmatprep.subr.mxu0 0.0
  %997 = vmatpush1.msra.mxu0 0.0
  %998 = vmatprep.subr.mxu0 0.0
  %999 = vmatpush1.msra.mxu0 0.0
  %1000 = vmatprep.subr.mxu0 0.0
  %1001 = vmatpush1.msra.mxu0 0.0
  %1002 = vmatprep.subr.mxu0 0.0
  %1003 = vmatpush1.msra.mxu0 0.0
  %1004 = vmatprep.subr.mxu0 0.0
  %1005 = vmatpush1.msra.mxu0 0.0
  %1006 = vmatprep.subr.mxu0 0.0
  %1007 = vmatpush1.msra.mxu0 0.0
  %1008 = vmatprep.subr.mxu0 0.0
  %1009 = vmatpush1.msra.mxu0 0.0
  %1010 = vmatprep.subr.mxu0 0.0
  %1011 = vmatpush1.msra.mxu0 0.0
  %1012 = vmatprep.subr.mxu0 0.0
  %1013 = vmatpush1.msra.mxu0 0.0
  %1014 = vmatprep.subr.mxu0 0.0
  %1015 = vmatpush1.msra.mxu0 0.0
  %1016 = vmatprep.subr.mxu0 0.0
  %1017 = vmatpush1.msra.mxu0 0.0
  %1018 = vmatprep.subr.mxu0 0.0
  %1019 = vmatpush1.msra.mxu0 0.0
  %1020 = vmatprep.subr.mxu0 0.0
  %1021 = vmatpush1.msra.mxu0 0.0
  %1022 = vmatprep.subr.mxu0 0.0
  %1023 = vmatpush1.msra.mxu0 0.0
  %1024 = vmatprep.subr.mxu0 0.0
  %1025 = vmatpush1.msra.mxu0 0.0
  %1026 = vmatprep.subr.mxu0 0.0
  %1027 = vmatpush1.msra.mxu0 0.0
  %1028 = vmatprep.subr.mxu0 0.0
  %1029 = vmatpush1.msra.mxu0 0.0
  %1030 = vmatprep.subr.mxu0 0.0
  %1031 = vmatpush1.msra.mxu0 0.0
  %1032 = vmatprep.subr.mxu0 0.0
  %1033 = vmatpush1.msra.mxu0 0.0
  %1034 = vmatprep.subr.mxu0 0.0
  %1035 = vmatpush1.msra.mxu0 0.0
  %1036 = vmatprep.subr.mxu0 0.0
  %1037 = vmatpush1.msra.mxu0 0.0
  %1038 = vmatprep.mubr.f32.mxu0 0.0
  %1039 = vmatmul.mubr.f32.gmra.mrb[0].mxu0 %v972
  %v1040 = vpop.f32.mrb[0].mxu0
  %v1041 = vadd.f32 0.0, %v1040
  %v1042 = vpop.f32.mrb[0].mxu0
  %1043 = vdwg.mxu0
  %v1045 = vrot.slane %v1041, 2
  %1046 = vrot.lane.b32.xlu0 %v1045, 32
  %v1047 = vpop.permute.xlu0 %1046
  %v1049 = vadd.f32 %v223, %v1047
  %v1050 = vtanh.pop %v1049
  %v1051 = vadd.f32 %v891, %v969
  %v1052 = vadd.f32 %v895, %v1050
  %v1054 = vsel %vm239, %v969, 0
  %1056 = vmatprep.subr.mxu0 0.0
  %1057 = vmatpush1.msra.mxu0 %v231
  %1058 = vmatprep.subr.mxu0 0.0
  %1059 = vmatpush1.msra.mxu0 %v232
  %1060 = vmatprep.subr.mxu0 0.0
  %1061 = vmatpush1.msra.mxu0 %v233
  %1062 = vmatprep.subr.mxu0 0.0
  %1063 = vmatpush1.msra.mxu0 %v234
  %1064 = vmatprep.subr.mxu0 0.0
  %1065 = vmatpush1.msra.mxu0 0.0
  %1066 = vmatprep.subr.mxu0 0.0
  %1067 = vmatpush1.msra.mxu0 0.0
  %1068 = vmatprep.subr.mxu0 0.0
  %1069 = vmatpush1.msra.mxu0 0.0
  %1070 = vmatprep.subr.mxu0 0.0
  %1071 = vmatpush1.msra.mxu0 0.0
  %1072 = vmatprep.subr.mxu0 0.0
  %1073 = vmatpush1.msra.mxu0 0.0
  %1074 = vmatprep.subr.mxu0 0.0
  %1075 = vmatpush1.msra.mxu0 0.0
  %1076 = vmatprep.subr.mxu0 0.0
  %1077 = vmatpush1.msra.mxu0 0.0
  %1078 = vmatprep.subr.mxu0 0.0
  %1079 = vmatpush1.msra.mxu0 0.0
  %1080 = vmatprep.subr.mxu0 0.0
  %1081 = vmatpush1.msra.mxu0 0.0
  %1082 = vmatprep.subr.mxu0 0.0
  %1083 = vmatpush1.msra.mxu0 0.0
  %1084 = vmatprep.subr.mxu0 0.0
  %1085 = vmatpush1.msra.mxu0 0.0
  %1086 = vmatprep.subr.mxu0 0.0
  %1087 = vmatpush1.msra.mxu0 0.0
  %1088 = vmatprep.subr.mxu0 0.0
  %1089 = vmatpush1.msra.mxu0 0.0
  %1090 = vmatprep.subr.mxu0 0.0
  %1091 = vmatpush1.msra.mxu0 0.0
  %1092 = vmatprep.subr.mxu0 0.0
  %1093 = vmatpush1.msra.mxu0 0.0
  %1094 = vmatprep.subr.mxu0 0.0
  %1095 = vmatpush1.msra.mxu0 0.0
  %1096 = vmatprep.subr.mxu0 0.0
  %1097 = vmatpush1.msra.mxu0 0.0
  %1098 = vmatprep.subr.mxu0 0.0
  %1099 = vmatpush1.msra.mxu0 0.0
  %1100 = vmatprep.subr.mxu0 0.0
  %1101 = vmatpush1.msra.mxu0 0.0
  %1102 = vmatprep.subr.mxu0 0.0
  %1103 = vmatpush1.msra.mxu0 0.0
  %1104 = vmatprep.subr.mxu0 0.0
  %1105 = vmatpush1.msra.mxu0 0.0
  %1106 = vmatprep.subr.mxu0 0.0
  %1107 = vmatpush1.msra.mxu0 0.0
  %1108 = vmatprep.subr.mxu0 0.0
  %1109 = vmatpush1.msra.mxu0 0.0
  %1110 = vmatprep.subr.mxu0 0.0
  %1111 = vmatpush1.msra.mxu0 0.0
  %1112 = vmatprep.subr.mxu0 0.0
  %1113 = vmatpush1.msra.mxu0 0.0
  %1114 = vmatprep.subr.mxu0 0.0
  %1115 = vmatpush1.msra.mxu0 0.0
  %1116 = vmatprep.subr.mxu0 0.0
  %1117 = vmatpush1.msra.mxu0 0.0
  %1118 = vmatprep.subr.mxu0 0.0
  %1119 = vmatpush1.msra.mxu0 0.0
  %1120 = vmatprep.mubr.f32.mxu0 0.0
  %1121 = vmatmul.mubr.f32.gmra.mrb[0].mxu0 %v1054
  %v1122 = vpop.f32.mrb[0].mxu0
  %v1123 = vadd.f32 0.0, %v1122
  %v1124 = vpop.f32.mrb[0].mxu0
  %1125 = vdwg.mxu0
  %v1127 = vrot.slane %v1123, 6
  %v1129 = vadd.f32 %v228, %v1127
  %v1130 = vtanh.pop %v1129
  %v1132 = vrot.slane %v1050, 6
  %1133 = vrot.lane.b32.xlu0 %v1132, 96
  %v1134 = vpop.permute.xlu0 %1133
  %v1135 = vsel %vm239, %v1134, 0
  %1137 = vmatprep.subr.mxu0 0.0
  %1138 = vmatpush1.msra.mxu0 %v235
  %1139 = vmatprep.subr.mxu0 0.0
  %1140 = vmatpush1.msra.mxu0 %v236
  %1141 = vmatprep.subr.mxu0 0.0
  %1142 = vmatpush1.msra.mxu0 %v237
  %1143 = vmatprep.subr.mxu0 0.0
  %1144 = vmatpush1.msra.mxu0 %v238
  %1145 = vmatprep.subr.mxu0 0.0
  %1146 = vmatpush1.msra.mxu0 0.0
  %1147 = vmatprep.subr.mxu0 0.0
  %1148 = vmatpush1.msra.mxu0 0.0
  %1149 = vmatprep.subr.mxu0 0.0
  %1150 = vmatpush1.msra.mxu0 0.0
  %1151 = vmatprep.subr.mxu0 0.0
  %1152 = vmatpush1.msra.mxu0 0.0
  %1153 = vmatprep.subr.mxu0 0.0
  %1154 = vmatpush1.msra.mxu0 0.0
  %1155 = vmatprep.subr.mxu0 0.0
  %1156 = vmatpush1.msra.mxu0 0.0
  %1157 = vmatprep.subr.mxu0 0.0
  %1158 = vmatpush1.msra.mxu0 0.0
  %1159 = vmatprep.subr.mxu0 0.0
  %1160 = vmatpush1.msra.mxu0 0.0
  %1161 = vmatprep.subr.mxu0 0.0
  %1162 = vmatpush1.msra.mxu0 0.0
  %1163 = vmatprep.subr.mxu0 0.0
  %1164 = vmatpush1.msra.mxu0 0.0
  %1165 = vmatprep.subr.mxu0 0.0
  %1166 = vmatpush1.msra.mxu0 0.0
  %1167 = vmatprep.subr.mxu0 0.0
  %1168 = vmatpush1.msra.mxu0 0.0
  %1169 = vmatprep.subr.mxu0 0.0
  %1170 = vmatpush1.msra.mxu0 0.0
  %1171 = vmatprep.subr.mxu0 0.0
  %1172 = vmatpush1.msra.mxu0 0.0
  %1173 = vmatprep.subr.mxu0 0.0
  %1174 = vmatpush1.msra.mxu0 0.0
  %1175 = vmatprep.subr.mxu0 0.0
  %1176 = vmatpush1.msra.mxu0 0.0
  %1177 = vmatprep.subr.mxu0 0.0
  %1178 = vmatpush1.msra.mxu0 0.0
  %1179 = vmatprep.subr.mxu0 0.0
  %1180 = vmatpush1.msra.mxu0 0.0
  %1181 = vmatprep.subr.mxu0 0.0
  %1182 = vmatpush1.msra.mxu0 0.0
  %1183 = vmatprep.subr.mxu0 0.0
  %1184 = vmatpush1.msra.mxu0 0.0
  %1185 = vmatprep.subr.mxu0 0.0
  %1186 = vmatpush1.msra.mxu0 0.0
  %1187 = vmatprep.subr.mxu0 0.0
  %1188 = vmatpush1.msra.mxu0 0.0
  %1189 = vmatprep.subr.mxu0 0.0
  %1190 = vmatpush1.msra.mxu0 0.0
  %1191 = vmatprep.subr.mxu0 0.0
  %1192 = vmatpush1.msra.mxu0 0.0
  %1193 = vmatprep.subr.mxu0 0.0
  %1194 = vmatpush1.msra.mxu0 0.0
  %1195 = vmatprep.subr.mxu0 0.0
  %1196 = vmatpush1.msra.mxu0 0.0
  %1197 = vmatprep.subr.mxu0 0.0
  %1198 = vmatpush1.msra.mxu0 0.0
  %1199 = vmatprep.subr.mxu0 0.0
  %1200 = vmatpush1.msra.mxu0 0.0
  %1201 = vmatprep.mubr.f32.mxu0 0.0
  %1202 = vmatmul.mubr.f32.gmra.mrb[0].mxu0 %v1135
  %v1203 = vpop.f32.mrb[0].mxu0
  %v1204 = vadd.f32 0.0, %v1203
  %v1205 = vpop.f32.mrb[0].mxu0
  %1206 = vdwg.mxu0
  %v1208 = vrot.slane %v1204, 4
  %1209 = vrot.lane.b32.xlu0 %v1208, 32
  %v1210 = vpop.permute.xlu0 %1209
  %v1212 = vadd.f32 %v223, %v1210
  %v1213 = vtanh.pop %v1212
  %v1215 = vrot.slane %v1130, 2
  %v1217 = vadd.f32 %v1051, %v1215
  %v1219 = vrot.slane %v1213, 6
  %v1221 = vadd.f32 %v1052, %v1219
  %v1222 = vsel %vm239, %v1215, 0
  %1224 = vmatprep.subr.mxu0 0.0
  %1225 = vmatpush1.msra.mxu0 %v231
  %1226 = vmatprep.subr.mxu0 0.0
  %1227 = vmatpush1.msra.mxu0 %v232
  %1228 = vmatprep.subr.mxu0 0.0
  %1229 = vmatpush1.msra.mxu0 %v233
  %1230 = vmatprep.subr.mxu0 0.0
  %1231 = vmatpush1.msra.mxu0 %v234
  %1232 = vmatprep.subr.mxu0 0.0
  %1233 = vmatpush1.msra.mxu0 0.0
  %1234 = vmatprep.subr.mxu0 0.0
  %1235 = vmatpush1.msra.mxu0 0.0
  %1236 = vmatprep.subr.mxu0 0.0
  %1237 = vmatpush1.msra.mxu0 0.0
  %1238 = vmatprep.subr.mxu0 0.0
  %1239 = vmatpush1.msra.mxu0 0.0
  %1240 = vmatprep.subr.mxu0 0.0
  %1241 = vmatpush1.msra.mxu0 0.0
  %1242 = vmatprep.subr.mxu0 0.0
  %1243 = vmatpush1.msra.mxu0 0.0
  %1244 = vmatprep.subr.mxu0 0.0
  %1245 = vmatpush1.msra.mxu0 0.0
  %1246 = vmatprep.subr.mxu0 0.0
  %1247 = vmatpush1.msra.mxu0 0.0
  %1248 = vmatprep.subr.mxu0 0.0
  %1249 = vmatpush1.msra.mxu0 0.0
  %1250 = vmatprep.subr.mxu0 0.0
  %1251 = vmatpush1.msra.mxu0 0.0
  %1252 = vmatprep.subr.mxu0 0.0
  %1253 = vmatpush1.msra.mxu0 0.0
  %1254 = vmatprep.subr.mxu0 0.0
  %1255 = vmatpush1.msra.mxu0 0.0
  %1256 = vmatprep.subr.mxu0 0.0
  %1257 = vmatpush1.msra.mxu0 0.0
  %1258 = vmatprep.subr.mxu0 0.0
  %1259 = vmatpush1.msra.mxu0 0.0
  %1260 = vmatprep.subr.mxu0 0.0
  %1261 = vmatpush1.msra.mxu0 0.0
  %1262 = vmatprep.subr.mxu0 0.0
  %1263 = vmatpush1.msra.mxu0 0.0
  %1264 = vmatprep.subr.mxu0 0.0
  %1265 = vmatpush1.msra.mxu0 0.0
  %1266 = vmatprep.subr.mxu0 0.0
  %1267 = vmatpush1.msra.mxu0 0.0
  %1268 = vmatprep.subr.mxu0 0.0
  %1269 = vmatpush1.msra.mxu0 0.0
  %1270 = vmatprep.subr.mxu0 0.0
  %1271 = vmatpush1.msra.mxu0 0.0
  %1272 = vmatprep.subr.mxu0 0.0
  %1273 = vmatpush1.msra.mxu0 0.0
  %1274 = vmatprep.subr.mxu0 0.0
  %1275 = vmatpush1.msra.mxu0 0.0
  %1276 = vmatprep.subr.mxu0 0.0
  %1277 = vmatpush1.msra.mxu0 0.0
  %1278 = vmatprep.subr.mxu0 0.0
  %1279 = vmatpush1.msra.mxu0 0.0
  %1280 = vmatprep.subr.mxu0 0.0
  %1281 = vmatpush1.msra.mxu0 0.0
  %1282 = vmatprep.subr.mxu0 0.0
  %1283 = vmatpush1.msra.mxu0 0.0
  %1284 = vmatprep.subr.mxu0 0.0
  %1285 = vmatpush1.msra.mxu0 0.0
  %1286 = vmatprep.subr.mxu0 0.0
  %1287 = vmatpush1.msra.mxu0 0.0
  %1288 = vmatprep.mubr.f32.mxu0 0.0
  %1289 = vmatmul.mubr.f32.gmra.mrb[0].mxu0 %v1222
  %v1290 = vpop.f32.mrb[0].mxu0
  %v1291 = vadd.f32 0.0, %v1290
  %v1292 = vpop.f32.mrb[0].mxu0
  %1293 = vdwg.mxu0
  %v1295 = vrot.slane %v1291, 4
  %v1297 = vadd.f32 %v228, %v1295
  %v1298 = vtanh.pop %v1297
  %v1299 = vrot.slane %v1213, 4
  %1300 = vrot.lane.b32.xlu0 %v1299, 96
  %v1301 = vpop.permute.xlu0 %1300
  %v1302 = vsel %vm239, %v1301, 0
  %1304 = vmatprep.subr.mxu0 0.0
  %1305 = vmatpush1.msra.mxu0 %v235
  %1306 = vmatprep.subr.mxu0 0.0
  %1307 = vmatpush1.msra.mxu0 %v236
  %1308 = vmatprep.subr.mxu0 0.0
  %1309 = vmatpush1.msra.mxu0 %v237
  %1310 = vmatprep.subr.mxu0 0.0
  %1311 = vmatpush1.msra.mxu0 %v238
  %1312 = vmatprep.subr.mxu0 0.0
  %1313 = vmatpush1.msra.mxu0 0.0
  %1314 = vmatprep.subr.mxu0 0.0
  %1315 = vmatpush1.msra.mxu0 0.0
  %1316 = vmatprep.subr.mxu0 0.0
  %1317 = vmatpush1.msra.mxu0 0.0
  %1318 = vmatprep.subr.mxu0 0.0
  %1319 = vmatpush1.msra.mxu0 0.0
  %1320 = vmatprep.subr.mxu0 0.0
  %1321 = vmatpush1.msra.mxu0 0.0
  %1322 = vmatprep.subr.mxu0 0.0
  %1323 = vmatpush1.msra.mxu0 0.0
  %1324 = vmatprep.subr.mxu0 0.0
  %1325 = vmatpush1.msra.mxu0 0.0
  %1326 = vmatprep.subr.mxu0 0.0
  %1327 = vmatpush1.msra.mxu0 0.0
  %1328 = vmatprep.subr.mxu0 0.0
  %1329 = vmatpush1.msra.mxu0 0.0
  %1330 = vmatprep.subr.mxu0 0.0
  %1331 = vmatpush1.msra.mxu0 0.0
  %1332 = vmatprep.subr.mxu0 0.0
  %1333 = vmatpush1.msra.mxu0 0.0
  %1334 = vmatprep.subr.mxu0 0.0
  %1335 = vmatpush1.msra.mxu0 0.0
  %1336 = vmatprep.subr.mxu0 0.0
  %1337 = vmatpush1.msra.mxu0 0.0
  %1338 = vmatprep.subr.mxu0 0.0
  %1339 = vmatpush1.msra.mxu0 0.0
  %1340 = vmatprep.subr.mxu0 0.0
  %1341 = vmatpush1.msra.mxu0 0.0
  %1342 = vmatprep.subr.mxu0 0.0
  %1343 = vmatpush1.msra.mxu0 0.0
  %1344 = vmatprep.subr.mxu0 0.0
  %1345 = vmatpush1.msra.mxu0 0.0
  %1346 = vmatprep.subr.mxu0 0.0
  %1347 = vmatpush1.msra.mxu0 0.0
  %1348 = vmatprep.subr.mxu0 0.0
  %1349 = vmatpush1.msra.mxu0 0.0
  %1350 = vmatprep.subr.mxu0 0.0
  %1351 = vmatpush1.msra.mxu0 0.0
  %1352 = vmatprep.subr.mxu0 0.0
  %1353 = vmatpush1.msra.mxu0 0.0
  %1354 = vmatprep.subr.mxu0 0.0
  %1355 = vmatpush1.msra.mxu0 0.0
  %1356 = vmatprep.subr.mxu0 0.0
  %1357 = vmatpush1.msra.mxu0 0.0
  %1358 = vmatprep.subr.mxu0 0.0
  %1359 = vmatpush1.msra.mxu0 0.0
  %1360 = vmatprep.subr.mxu0 0.0
  %1361 = vmatpush1.msra.mxu0 0.0
  %1362 = vmatprep.subr.mxu0 0.0
  %1363 = vmatpush1.msra.mxu0 0.0
  %1364 = vmatprep.subr.mxu0 0.0
  %1365 = vmatpush1.msra.mxu0 0.0
  %1366 = vmatprep.subr.mxu0 0.0
  %1367 = vmatpush1.msra.mxu0 0.0
  %1368 = vmatprep.mubr.f32.mxu0 0.0
  %1369 = vmatmul.mubr.f32.gmra.mrb[0].mxu0 %v1302
  %v1370 = vpop.f32.mrb[0].mxu0
  %v1371 = vadd.f32 0.0, %v1370
  %v1372 = vpop.f32.mrb[0].mxu0
  %1373 = vdwg.mxu0
  %v1375 = vrot.slane %v1371, 6
  %1376 = vrot.lane.b32.xlu0 %v1375, 32
  %v1377 = vpop.permute.xlu0 %1376
  %v1379 = vadd.f32 %v223, %v1377
  %v1380 = vtanh.pop %v1379
  %v1382 = vrot.slane %v1298, 4
  %v1384 = vadd.f32 %v1217, %v1382
  %v1386 = vrot.slane %v1380, 4
  %v1388 = vadd.f32 %v1221, %v1386
  %v1389 = vsel %vm239, %v1382, 0
  %1391 = vmatprep.subr.mxu0 0.0
  %1392 = vmatpush1.msra.mxu0 %v231
  %1393 = vmatprep.subr.mxu0 0.0
  %1394 = vmatpush1.msra.mxu0 %v232
  %1395 = vmatprep.subr.mxu0 0.0
  %1396 = vmatpush1.msra.mxu0 %v233
  %1397 = vmatprep.subr.mxu0 0.0
  %1398 = vmatpush1.msra.mxu0 %v234
  %1399 = vmatprep.subr.mxu0 0.0
  %1400 = vmatpush1.msra.mxu0 0.0
  %1401 = vmatprep.subr.mxu0 0.0
  %1402 = vmatpush1.msra.mxu0 0.0
  %1403 = vmatprep.subr.mxu0 0.0
  %1404 = vmatpush1.msra.mxu0 0.0
  %1405 = vmatprep.subr.mxu0 0.0
  %1406 = vmatpush1.msra.mxu0 0.0
  %1407 = vmatprep.subr.mxu0 0.0
  %1408 = vmatpush1.msra.mxu0 0.0
  %1409 = vmatprep.subr.mxu0 0.0
  %1410 = vmatpush1.msra.mxu0 0.0
  %1411 = vmatprep.subr.mxu0 0.0
  %1412 = vmatpush1.msra.mxu0 0.0
  %1413 = vmatprep.subr.mxu0 0.0
  %1414 = vmatpush1.msra.mxu0 0.0
  %1415 = vmatprep.subr.mxu0 0.0
  %1416 = vmatpush1.msra.mxu0 0.0
  %1417 = vmatprep.subr.mxu0 0.0
  %1418 = vmatpush1.msra.mxu0 0.0
  %1419 = vmatprep.subr.mxu0 0.0
  %1420 = vmatpush1.msra.mxu0 0.0
  %1421 = vmatprep.subr.mxu0 0.0
  %1422 = vmatpush1.msra.mxu0 0.0
  %1423 = vmatprep.subr.mxu0 0.0
  %1424 = vmatpush1.msra.mxu0 0.0
  %1425 = vmatprep.subr.mxu0 0.0
  %1426 = vmatpush1.msra.mxu0 0.0
  %1427 = vmatprep.subr.mxu0 0.0
  %1428 = vmatpush1.msra.mxu0 0.0
  %1429 = vmatprep.subr.mxu0 0.0
  %1430 = vmatpush1.msra.mxu0 0.0
  %1431 = vmatprep.subr.mxu0 0.0
  %1432 = vmatpush1.msra.mxu0 0.0
  %1433 = vmatprep.subr.mxu0 0.0
  %1434 = vmatpush1.msra.mxu0 0.0
  %1435 = vmatprep.subr.mxu0 0.0
  %1436 = vmatpush1.msra.mxu0 0.0
  %1437 = vmatprep.subr.mxu0 0.0
  %1438 = vmatpush1.msra.mxu0 0.0
  %1439 = vmatprep.subr.mxu0 0.0
  %1440 = vmatpush1.msra.mxu0 0.0
  %1441 = vmatprep.subr.mxu0 0.0
  %1442 = vmatpush1.msra.mxu0 0.0
  %1443 = vmatprep.subr.mxu0 0.0
  %1444 = vmatpush1.msra.mxu0 0.0
  %1445 = vmatprep.subr.mxu0 0.0
  %1446 = vmatpush1.msra.mxu0 0.0
  %1447 = vmatprep.subr.mxu0 0.0
  %1448 = vmatpush1.msra.mxu0 0.0
  %1449 = vmatprep.subr.mxu0 0.0
  %1450 = vmatpush1.msra.mxu0 0.0
  %1451 = vmatprep.subr.mxu0 0.0
  %1452 = vmatpush1.msra.mxu0 0.0
  %1453 = vmatprep.subr.mxu0 0.0
  %1454 = vmatpush1.msra.mxu0 0.0
  %1455 = vmatprep.mubr.f32.mxu0 0.0
  %1456 = vmatmul.mubr.f32.gmra.mrb[0].mxu0 %v1389
  %v1457 = vpop.f32.mrb[0].mxu0
  %v1458 = vadd.f32 0.0, %v1457
  %v1459 = vpop.f32.mrb[0].mxu0
  %1460 = vdwg.mxu0
  %v1462 = vrot.slane %v1458, 2
  %v1464 = vadd.f32 %v228, %v1462
  %v1465 = vtanh.pop %v1464
  %v1466 = vrot.slane %v1380, 2
  %1467 = vrot.lane.b32.xlu0 %v1466, 96
  %v1468 = vpop.permute.xlu0 %1467
  %v1469 = vsel %vm239, %v1468, 0
  %1471 = vmatprep.subr.mxu0 0.0
  %1472 = vmatpush1.msra.mxu0 %v235
  %1473 = vmatprep.subr.mxu0 0.0
  %1474 = vmatpush1.msra.mxu0 %v236
  %1475 = vmatprep.subr.mxu0 0.0
  %1476 = vmatpush1.msra.mxu0 %v237
  %1477 = vmatprep.subr.mxu0 0.0
  %1478 = vmatpush1.msra.mxu0 %v238
  %1479 = vmatprep.subr.mxu0 0.0
  %1480 = vmatpush1.msra.mxu0 0.0
  %1481 = vmatprep.subr.mxu0 0.0
  %1482 = vmatpush1.msra.mxu0 0.0
  %1483 = vmatprep.subr.mxu0 0.0
  %1484 = vmatpush1.msra.mxu0 0.0
  %1485 = vmatprep.subr.mxu0 0.0
  %1486 = vmatpush1.msra.mxu0 0.0
  %1487 = vmatprep.subr.mxu0 0.0
  %1488 = vmatpush1.msra.mxu0 0.0
  %1489 = vmatprep.subr.mxu0 0.0
  %1490 = vmatpush1.msra.mxu0 0.0
  %1491 = vmatprep.subr.mxu0 0.0
  %1492 = vmatpush1.msra.mxu0 0.0
  %1493 = vmatprep.subr.mxu0 0.0
  %1494 = vmatpush1.msra.mxu0 0.0
  %1495 = vmatprep.subr.mxu0 0.0
  %1496 = vmatpush1.msra.mxu0 0.0
  %1497 = vmatprep.subr.mxu0 0.0
  %1498 = vmatpush1.msra.mxu0 0.0
  %1499 = vmatprep.subr.mxu0 0.0
  %1500 = vmatpush1.msra.mxu0 0.0
  %1501 = vmatprep.subr.mxu0 0.0
  %1502 = vmatpush1.msra.mxu0 0.0
  %1503 = vmatprep.subr.mxu0 0.0
  %1504 = vmatpush1.msra.mxu0 0.0
  %1505 = vmatprep.subr.mxu0 0.0
  %1506 = vmatpush1.msra.mxu0 0.0
  %1507 = vmatprep.subr.mxu0 0.0
  %1508 = vmatpush1.msra.mxu0 0.0
  %1509 = vmatprep.subr.mxu0 0.0
  %1510 = vmatpush1.msra.mxu0 0.0
  %1511 = vmatprep.subr.mxu0 0.0
  %1512 = vmatpush1.msra.mxu0 0.0
  %1513 = vmatprep.subr.mxu0 0.0
  %1514 = vmatpush1.msra.mxu0 0.0
  %1515 = vmatprep.subr.mxu0 0.0
  %1516 = vmatpush1.msra.mxu0 0.0
  %1517 = vmatprep.subr.mxu0 0.0
  %1518 = vmatpush1.msra.mxu0 0.0
  %1519 = vmatprep.subr.mxu0 0.0
  %1520 = vmatpush1.msra.mxu0 0.0
  %1521 = vmatprep.subr.mxu0 0.0
  %1522 = vmatpush1.msra.mxu0 0.0
  %1523 = vmatprep.subr.mxu0 0.0
  %1524 = vmatpush1.msra.mxu0 0.0
  %1525 = vmatprep.subr.mxu0 0.0
  %1526 = vmatpush1.msra.mxu0 0.0
  %1527 = vmatprep.subr.mxu0 0.0
  %1528 = vmatpush1.msra.mxu0 0.0
  %1529 = vmatprep.subr.mxu0 0.0
  %1530 = vmatpush1.msra.mxu0 0.0
  %1531 = vmatprep.subr.mxu0 0.0
  %1532 = vmatpush1.msra.mxu0 0.0
  %1533 = vmatprep.subr.mxu0 0.0
  %1534 = vmatpush1.msra.mxu0 0.0
  %1535 = vmatprep.mubr.f32.mxu0 0.0
  %1536 = vmatmul.mubr.f32.gmra.mrb[0].mxu0 %v1469
  %v1537 = vpop.f32.mrb[0].mxu0
  %v1538 = vadd.f32 0.0, %v1537
  %v1539 = vpop.f32.mrb[0].mxu0
  %1540 = vdwg.mxu0
  %1542 = vrot.lane.b32.xlu0 %v1538, 32
  %v1543 = vpop.permute.xlu0 %1542
  %v1545 = vadd.f32 %v223, %v1543
  %v1546 = vtanh.pop %v1545
  %v1548 = vrot.slane %v1465, 6
  %v1550 = vadd.f32 %v1384, %v1548
  %v1552 = vrot.slane %v1546, 2
  %v1554 = vadd.f32 %v1388, %v1552
  %v1555 = vld [vmem:[%s6] sm:$0x1]
  %v1557 = vlaneseq
  %v1558 = vshrl.u32 %v1557, 7
  %v1559 = vsub.s32 0, %v1558
  %v1560 = vrot.slane %v1555, %v1559
  %v1562 = vmul.f32 %v1550, %v1560
  %vm1563 = vcmask 254976
  %v1564 = vsel %vm1563, %v1562, 0.0
  %1565 = vadd.xlane.f32.xlu0 %v1564
  %v1566 = vpop.xlane.xlu0 %1565
  %v1567 = vmul.f32 %v1554, %v1560
  %1569 = vrot.lane.b32.xlu0 %v1567, 96
  %v1570 = vpop.permute.xlu0 %1569
  %vm1572 = vcmask 261126
  %v1573 = vsel %vm1572, %v1570, 0.0
  %1574 = vadd.xlane.f32.xlu0 %v1573
  %v1575 = vpop.xlane.xlu0 %1574
  %v1577 = vrot.slane %v1575, 6
  %v1579 = vadd.f32 %v1566, %v1577
  %v1580 = vmul.f32 %v1579, 0.125
  %v1581 = vld [vmem:[#allocation2] sm:$0x1]
  %v1583 = vlaneseq
  %v1584 = vshrl.u32 %v1583, 7
  %v1585 = vsub.s32 0, %v1584
  %v1586 = vrot.slane %v1581, %v1585
  %v1588 = vadd.f32 %v1580, %v1586
  %v1589 = vxor.u32 %v1588, 2147483648
  %v1590 = vmul.f32 %v1589, 1.442695
  %v1591 = vpow.pop %v1590
  %v1592 = vadd.f32 %v1591, 1.0
  %v1593 = vrcp.pop %v1592
  %v1594 = vmul.f32 1.0, %v1593
  %vm1595 = vcmask 1024
  %1596 = vst.msk [vmem:[%s8] sm:$0x3] %vm1595, %v1594
  // Predicated region
  $region34: #{rnn_forward.1} parent=0 // pred_check
    _
  $region35: #{rnn_forward.1} parent=0 // pred_check_branch
    %1598 = sbr.rel (0) target = $region37
  $region36: #{rnn_forward.1} parent=0 // pred_region
    _
  $region37: #{rnn_forward.1} parent=0 // pred_fallthru
    _
  // Predicated region
  $region38: #{rnn_forward.1} parent=0 // pred_check
    _
  $region39: #{rnn_forward.1} parent=0 // pred_check_branch
    %1600 = sbr.rel (0) target = $region41
  $region40: #{rnn_forward.1} parent=0 // pred_region
    _
  $region41: #{rnn_forward.1} parent=0 // pred_fallthru
    _

</llo_original>
